<compile_context>
chip_gen: v7x
topology: tpu7x:2x2x1
jax: 0.10.0
libtpu: 0.0.40
codegen_flags: <defaults>
</compile_context>

<pallas_src>
import math

import jax
import jax.numpy as jnp
from jax.experimental import pallas as pl
from jax.experimental.pallas import tpu as pltpu


_NEG_INF = -1e30  # finite "minus infinity" to avoid inf-inf NaNs


def _round_up(x, m):
    return ((x + m - 1) // m) * m


# ----------------------------------------------------------------------------
# Kernel 1: tangent-space alignment loss (hot path) — tiled, online softmax
# ----------------------------------------------------------------------------
def _tangent_loss_kernel(vqa_ref, eq_ref, ek_ref, vka_ref, o_ref,
                         m_sc, l_sc, num_sc):
    kb = pl.program_id(1)

    @pl.when(kb == 0)
    def _init():
        m_sc[...] = jnp.full_like(m_sc, _NEG_INF)
        l_sc[...] = jnp.zeros_like(l_sc)
        num_sc[...] = jnp.zeros_like(num_sc)

    # similarity logits E_q @ E_k^T: contract last dims of both operands
    # (trans-B semantics) -> feeds the MXU directly, no in-kernel transpose.
    logits = jax.lax.dot_general(
        eq_ref[...], ek_ref[...],
        dimension_numbers=(((1,), (1,)), ((), ())),
        preferred_element_type=jnp.float32)

    # online softmax update (no key masking needed: padded keys carry all-zero
    # augmented columns, so they contribute nothing to PV / l / num).
    m_prev = m_sc[...]
    m_new = jnp.maximum(m_prev, jnp.max(logits, axis=1, keepdims=True))
    alpha = jnp.exp(m_prev - m_new)
    p = jnp.exp(logits - m_new)                       # (tq, tk) f32, un-normalized weights

    # all per-key reductions folded into one MXU matmul against the augmented keys:
    #   PV[:, 0]   = sum_j p_ij * valid_j            (softmax denominator)
    #   PV[:, 1]   = sum_j p_ij * ||v_j||^2
    #   PV[:, 2:]  = sum_j p_ij * v_j
    vka = vka_ref[...]
    pv = jnp.dot(p.astype(vka.dtype), vka, preferred_element_type=jnp.float32)

    l_step = pv[:, 0:1]
    # Vq_aug = [||v_i||^2, 1, -2 v_i, 0] pairs with the columns above, so one row
    # reduce yields  sum_j p_ij * (||v_i||^2 + ||v_j||^2 - 2 v_i.v_j).
    num_step = jnp.sum(vqa_ref[...] * pv, axis=1, keepdims=True)

    l_sc[...] = alpha * l_sc[...] + l_step
    num_sc[...] = alpha * num_sc[...] + num_step
    m_sc[...] = m_new

    @pl.when(kb == pl.num_programs(1) - 1)
    def _finalize():
        # normalization folded to once per query row (EUP approx reciprocal).
        o_ref[...] = num_sc[...] * pl.reciprocal(l_sc[...], approx=True)


def tangent_space_loss(velocity, expression_latent, *, block_q=512, block_k=512,
                       matmul_dtype=jnp.bfloat16):
    """Streaming tangent-space loss. Returns a scalar (f32)."""
    n, g = velocity.shape
    assert expression_latent.shape[0] == n
    latent = expression_latent.shape[1]

    n_pad = _round_up(n, 128)
    pad = n_pad - n
    g_aug = _round_up(g + 2, 128)                     # velocity + [valid, ||v||^2] columns
    mm_bytes = jnp.dtype(matmul_dtype).itemsize

    v32 = velocity.astype(jnp.float32)
    e32 = expression_latent.astype(jnp.float32)
    if pad:
        v32 = jnp.pad(v32, ((0, pad), (0, 0)))
        e32 = jnp.pad(e32, ((0, pad), (0, 0)))

    # row squared-norms hoisted out of the pairwise kernel (f32, exact)
    sq = jnp.sum(v32 * v32, axis=1, keepdims=True)                     # (n_pad, 1)
    valid = (jnp.arange(n_pad) < n).astype(jnp.float32)[:, None]       # (n_pad, 1)
    col_pad = g_aug - (g + 2)

    # MXU-side augmented keys (matmul dtype) and VPU-side augmented queries (f32).
    vk_aug = jnp.pad(jnp.concatenate([valid, sq, v32], axis=1),
                     ((0, 0), (0, col_pad))).astype(matmul_dtype)
    vq_aug = jnp.pad(jnp.concatenate([sq, valid, -2.0 * v32], axis=1),
                     ((0, 0), (0, col_pad)))                           # f32
    e_mm = e32.astype(matmul_dtype)

    # --- tiling: lane/sublane aligned tiles that divide the padded size -------
    def _fit(req):
        t = min(_round_up(max(req, 128), 128), n_pad)
        while n_pad % t:
            t -= 128
        return t

    tq = _fit(block_q)
    tk = _fit(block_k)

    # v7x megacore: make sure the "parallel" query axis has >= 2 tiles.
    if n_pad >= 256 and n_pad // tq < 2:
        tq = _fit(n_pad // 2)

    # generation-aware VMEM budget (v5e/v6e: 128 MiB, v7x: 64 MiB per TC).
    try:
        vmem_cap = pltpu.get_tpu_info().vmem_capacity_bytes
    except Exception:
        vmem_cap = 64 * 1024 * 1024
    budget = int(vmem_cap) * 3 // 4

    def _vmem_bytes(tq_, tk_):
        per_in = (tq_ * g_aug * 4 + tq_ * latent * mm_bytes
                  + tk_ * latent * mm_bytes + tk_ * g_aug * mm_bytes)
        return 2 * per_in + 2 * tq_ * 4 + 3 * tq_ * 4 + (1 << 20)

    while _vmem_bytes(tq, tk) > budget and tk > 128:
        tk = _fit(tk - 128)
    while _vmem_bytes(tq, tk) > budget and tq > 128:
        tq = _fit(tq - 128)

    grid = (n_pad // tq, n_pad // tk)

    per_row = pl.pallas_call(
        _tangent_loss_kernel,
        out_shape=jax.ShapeDtypeStruct((n_pad, 1), jnp.float32),
        grid=grid,
        in_specs=[
            pl.BlockSpec((tq, g_aug), lambda i, k: (i, 0)),    # augmented v (query, f32)
            pl.BlockSpec((tq, latent), lambda i, k: (i, 0)),   # e (query tile)
            pl.BlockSpec((tk, latent), lambda i, k: (k, 0)),   # e (key tile)
            pl.BlockSpec((tk, g_aug), lambda i, k: (k, 0)),    # augmented v (key, MXU dtype)
        ],
        out_specs=pl.BlockSpec((tq, 1), lambda i, k: (i, 0)),  # written once per query tile
        scratch_shapes=[
            pltpu.VMEM((tq, 1), jnp.float32),   # running max
            pltpu.VMEM((tq, 1), jnp.float32),   # running denom
            pltpu.VMEM((tq, 1), jnp.float32),   # running weighted-distance numerator
        ],
        compiler_params=pltpu.CompilerParams(
            dimension_semantics=("parallel", "arbitrary"),
            vmem_limit_bytes=budget,
        ),
    )(vq_aug, e_mm, e_mm, vk_aug)

    return jnp.sum(per_row[:n, 0]) / (n * n)


# ----------------------------------------------------------------------------
# Kernel 2: coefficient_net (Linear -> ReLU -> Dropout(eval) -> Linear -> Softmax)
# ----------------------------------------------------------------------------
def _coeff_net_kernel(e_ref, w1_ref, b1_ref, w2_ref, b2_ref, o_ref):
    h = jnp.dot(e_ref[...], w1_ref[...], preferred_element_type=jnp.float32) + b1_ref[...]
    h = jnp.maximum(h, 0.0)
    # TODO(synk): nn.Dropout(0.1) is identity in eval mode; training-mode mask not applied.
    logits = (jnp.dot(h.astype(w2_ref.dtype), w2_ref[...],
                      preferred_element_type=jnp.float32) + b2_ref[...])
    m = jnp.max(logits, axis=1, keepdims=True)
    ex = jnp.exp(logits - m)
    o_ref[...] = ex * pl.reciprocal(jnp.sum(ex, axis=1, keepdims=True), approx=True)


def coefficient_net(expression_latent, w1, b1, w2, b2, *, block_rows=256,
                    matmul_dtype=jnp.bfloat16):
    n, latent = expression_latent.shape
    hidden, k_out = w2.shape
    k_pad = _round_up(k_out, 128)                    # lane-dense output (30 -> 128)

    tr = min(_round_up(block_rows, 8), _round_up(n, 8))
    n_pad = _round_up(n, tr)

    e = expression_latent.astype(jnp.float32)
    if n_pad != n:
        e = jnp.pad(e, ((0, n_pad - n), (0, 0)))
    e = e.astype(matmul_dtype)

    w1c = w1.astype(matmul_dtype)
    w2p = jnp.pad(w2, ((0, 0), (0, k_pad - k_out))).astype(matmul_dtype)
    b1r = b1.reshape(1, -1).astype(jnp.float32)
    # padded logit columns get a huge negative bias -> exp underflows to 0,
    # so the softmax over the real n_neighbors columns is unaffected.
    b2p = jnp.pad(b2.reshape(1, -1).astype(jnp.float32),
                  ((0, 0), (0, k_pad - k_out)), constant_values=_NEG_INF)

    full = lambda shp: pl.BlockSpec(shp, lambda i: (0, 0))
    out = pl.pallas_call(
        _coeff_net_kernel,
        out_shape=jax.ShapeDtypeStruct((n_pad, k_pad), jnp.float32),
        grid=(n_pad // tr,),
        in_specs=[
            pl.BlockSpec((tr, latent), lambda i: (i, 0)),
            full(w1c.shape), full(b1r.shape), full(w2p.shape), full(b2p.shape),
        ],
        out_specs=pl.BlockSpec((tr, k_pad), lambda i: (i, 0)),
        compiler_params=pltpu.CompilerParams(dimension_semantics=("parallel",)),
    )(e, w1c, b1r, w2p, b2p)
    return out[:n, :k_out]


# ----------------------------------------------------------------------------
# Parameter init (xavier_uniform, deterministic) + module wrapper
# ----------------------------------------------------------------------------
def xavier_uniform(key, fan_in, fan_out):
    bound = math.sqrt(6.0 / (fan_in + fan_out))
    return jax.random.uniform(key, (fan_in, fan_out), jnp.float32, -bound, bound)


def make_params(latent_dim=64, n_neighbors=30, seed=0):
    k1, k2 = jax.random.split(jax.random.PRNGKey(seed))
    w1 = xavier_uniform(k1, latent_dim, 128)
    b1 = jnp.zeros((1, 128), jnp.float32)
    w2 = xavier_uniform(k2, 128, n_neighbors)
    b2 = jnp.zeros((1, n_neighbors), jnp.float32)
    return w1, b1, w2, b2


def tangent_space_loss_forward(velocity, expression_latent, params,
                               neighbor_indices=None, *,
                               matmul_dtype=jnp.bfloat16, compute_phi=False):
    """Mirrors TangentSpaceLoss.forward: returns the scalar loss.

    In the reference module phi_coeffs is computed but never used by the loss,
    so by default (compute_phi=False) the dead coefficient_net compute is skipped.
    """
    del neighbor_indices  # unused in the reference forward as well
    if compute_phi:
        _ = coefficient_net(expression_latent, *params, matmul_dtype=matmul_dtype)
    return tangent_space_loss(velocity, expression_latent, matmul_dtype=matmul_dtype)


if __name__ == "__main__":
    key = jax.random.PRNGKey(0)
    kv, ke = jax.random.split(key)

    n_cells, n_genes, latent_dim, n_neighbors = 200, 80, 64, 30
    velocity = jax.random.normal(kv, (n_cells, n_genes), jnp.float32)
    # scale latents so the row-softmax is not degenerate (meaningful check)
    expression_latent = 0.15 * jax.random.normal(ke, (n_cells, latent_dim), jnp.float32)

    params = make_params(latent_dim=latent_dim, n_neighbors=n_neighbors, seed=0)
    w1, b1, w2, b2 = params

    # ---- pure-JAX references ----
    sim = jax.nn.softmax(expression_latent @ expression_latent.T, axis=1)
    diff = velocity[:, None, :] - velocity[None, :, :]
    ref_loss = jnp.sum(sim * jnp.sum(diff ** 2, axis=2)) / (n_cells * n_cells)
    ref_phi = jax.nn.softmax(jax.nn.relu(expression_latent @ w1 + b1) @ w2 + b2, axis=1)

    # ---- tiled kernel, f32 MXU operands (tight check; exercises 2x2 grid + row padding) ----
    loss_f32 = tangent_space_loss(velocity, expression_latent,
                                  block_q=128, block_k=128, matmul_dtype=jnp.float32)
    loss_f32 = jax.block_until_ready(loss_f32)
    assert jnp.allclose(loss_f32, ref_loss, rtol=3e-2, atol=1e-3), (float(loss_f32), float(ref_loss))

    # ---- default perf path: bf16 MXU operands, f32 accumulation, default (large) tiles ----
    loss_bf16 = tangent_space_loss(velocity, expression_latent,
                                   matmul_dtype=jnp.bfloat16)
    loss_bf16 = jax.block_until_ready(loss_bf16)
    assert jnp.allclose(loss_bf16, ref_loss, rtol=8e-2, atol=1e-2), (float(loss_bf16), float(ref_loss))

    # ---- forward wrapper (returns only the loss, like the PyTorch module) ----
    loss_fwd = jax.block_until_ready(
        tangent_space_loss_forward(velocity, expression_latent, params))
    assert jnp.allclose(loss_fwd, ref_loss, rtol=8e-2, atol=1e-2), (float(loss_fwd), float(ref_loss))

    # ---- coefficient_net kernel (part of the module; unused by the loss) ----
    phi = coefficient_net(expression_latent, *params, block_rows=64,
                          matmul_dtype=jnp.float32)
    phi = jax.block_until_ready(phi)
    assert phi.shape == (n_cells, n_neighbors)
    assert jnp.allclose(phi, ref_phi, rtol=2e-2, atol=2e-3), float(jnp.max(jnp.abs(phi - ref_phi)))
    assert jnp.allclose(jnp.sum(phi, axis=1), 1.0, atol=5e-3)

    print("KERNEL_OK")
</pallas_src>

<mosaic_0001>
module attributes {stable_mosaic.version = 11 : i64} {
  func.func @_tangent_loss_kernel(%arg0: i32, %arg1: i32, %arg2: memref<128x128xf32, #tpu.memory_space<vmem>>, %arg3: memref<128x64xf32, #tpu.memory_space<vmem>>, %arg4: memref<128x64xf32, #tpu.memory_space<vmem>>, %arg5: memref<128x128xf32, #tpu.memory_space<vmem>>, %arg6: memref<128x1xf32, #tpu.memory_space<vmem>>, %arg7: memref<128x1xf32, #tpu.memory_space<vmem>>, %arg8: memref<128x1xf32, #tpu.memory_space<vmem>>, %arg9: memref<128x1xf32, #tpu.memory_space<vmem>>) attributes {dimension_semantics = [#tpu.dimension_semantics<parallel>, #tpu.dimension_semantics<arbitrary>], iteration_bounds = array<i64: 2, 2>, scalar_prefetch = 0 : i64, scratch_operands = 3 : i64, tpu.core_type = #tpu.core_type<tc>, window_params = [{transform_indices = @transform_0, window_bounds = array<i64: 128, 128>}, {transform_indices = @transform_1, window_bounds = array<i64: 128, 64>}, {transform_indices = @transform_2, window_bounds = array<i64: 128, 64>}, {transform_indices = @transform_3, window_bounds = array<i64: 128, 128>}, {transform_indices = @transform_4, window_bounds = array<i64: 128, 1>}]} {
    %c0_i32 = arith.constant 0 : i32
    %0 = arith.cmpi eq, %arg1, %c0_i32 : i32
    %1 = arith.extui %0 : i1 to i32
    %c0_i32_0 = arith.constant 0 : i32
    %2 = arith.cmpi ne, %1, %c0_i32_0 : i32
    scf.if %2 {
      %cst_24 = arith.constant -1.000000e+30 : f32
      %34 = vector.broadcast %cst_24 : f32 to vector<128x1xf32>
      %c0_25 = arith.constant 0 : index
      %c0_26 = arith.constant 0 : index
      %35 = vector.load %arg7[%c0_25, %c0_26] : memref<128x1xf32, #tpu.memory_space<vmem>>, vector<128x1xf32>
      tpu.vector_store %arg7[%c0_25, %c0_26], %34 {strides = array<i32>} : memref<128x1xf32, #tpu.memory_space<vmem>>, vector<128x1xf32>,
      %cst_27 = arith.constant 0.000000e+00 : f32
      %36 = vector.broadcast %cst_27 : f32 to vector<128x1xf32>
      %c0_28 = arith.constant 0 : index
      %c0_29 = arith.constant 0 : index
      %37 = vector.load %arg8[%c0_28, %c0_29] : memref<128x1xf32, #tpu.memory_space<vmem>>, vector<128x1xf32>
      tpu.vector_store %arg8[%c0_28, %c0_29], %36 {strides = array<i32>} : memref<128x1xf32, #tpu.memory_space<vmem>>, vector<128x1xf32>,
      %cst_30 = arith.constant 0.000000e+00 : f32
      %38 = vector.broadcast %cst_30 : f32 to vector<128x1xf32>
      %c0_31 = arith.constant 0 : index
      %c0_32 = arith.constant 0 : index
      %39 = vector.load %arg9[%c0_31, %c0_32] : memref<128x1xf32, #tpu.memory_space<vmem>>, vector<128x1xf32>
      tpu.vector_store %arg9[%c0_31, %c0_32], %38 {strides = array<i32>} : memref<128x1xf32, #tpu.memory_space<vmem>>, vector<128x1xf32>,
    } else {
    }
    %c0 = arith.constant 0 : index
    %c0_1 = arith.constant 0 : index
    %3 = vector.load %arg3[%c0, %c0_1] : memref<128x64xf32, #tpu.memory_space<vmem>>, vector<128x64xf32>
    %c0_2 = arith.constant 0 : index
    %c0_3 = arith.constant 0 : index
    %4 = vector.load %arg4[%c0_2, %c0_3] : memref<128x64xf32, #tpu.memory_space<vmem>>, vector<128x64xf32>
    %cst = arith.constant dense<0.000000e+00> : vector<128x128xf32>
    %5 = tpu.matmul %3, %4, %cst {dimension_numbers = #tpu.dot_dimension_numbers<[1], [1], [0], [0], [0, 0, 1, 0], [], []>} : vector<128x64xf32>, vector<128x64xf32>, vector<128x128xf32> -> vector<128x128xf32>
    %c0_4 = arith.constant 0 : index
    %c0_5 = arith.constant 0 : index
    %6 = vector.load %arg7[%c0_4, %c0_5] : memref<128x1xf32, #tpu.memory_space<vmem>>, vector<128x1xf32>
    %cst_6 = arith.constant dense<0xFF800000> : vector<128xf32>
    %7 = vector.multi_reduction <maximumf>, %5, %cst_6 [1] : vector<128x128xf32> to vector<128xf32>
    %8 = vector.shape_cast %7 : vector<128xf32> to vector<128x1xf32>
    %9 = arith.maximumf %6, %8 : vector<128x1xf32>
    %10 = arith.subf %6, %9 : vector<128x1xf32>
    %11 = math.exp %10 : vector<128x1xf32>
    %12 = vector.broadcast %9 : vector<128x1xf32> to vector<128x128xf32>
    %13 = arith.subf %5, %12 : vector<128x128xf32>
    %14 = math.exp %13 : vector<128x128xf32>
    %c0_7 = arith.constant 0 : index
    %c0_8 = arith.constant 0 : index
    %15 = vector.load %arg5[%c0_7, %c0_8] : memref<128x128xf32, #tpu.memory_space<vmem>>, vector<128x128xf32>
    %cst_9 = arith.constant dense<0.000000e+00> : vector<128x128xf32>
    %16 = tpu.matmul %14, %15, %cst_9 {dimension_numbers = #tpu.dot_dimension_numbers<[1], [0], [0], [1], [0, 0, 1, 1], [], []>} : vector<128x128xf32>, vector<128x128xf32>, vector<128x128xf32> -> vector<128x128xf32>
    %17 = vector.extract_strided_slice %16 {offsets = [0, 0], sizes = [128, 1], strides = [1, 1]} : vector<128x128xf32> to vector<128x1xf32>
    %c0_10 = arith.constant 0 : index
    %c0_11 = arith.constant 0 : index
    %18 = vector.load %arg2[%c0_10, %c0_11] : memref<128x128xf32, #tpu.memory_space<vmem>>, vector<128x128xf32>
    %19 = arith.mulf %18, %16 : vector<128x128xf32>
    %cst_12 = arith.constant dense<0.000000e+00> : vector<128xf32>
    %20 = vector.multi_reduction <add>, %19, %cst_12 [1] : vector<128x128xf32> to vector<128xf32>
    %21 = vector.shape_cast %20 : vector<128xf32> to vector<128x1xf32>
    %c0_13 = arith.constant 0 : index
    %c0_14 = arith.constant 0 : index
    %22 = vector.load %arg8[%c0_13, %c0_14] : memref<128x1xf32, #tpu.memory_space<vmem>>, vector<128x1xf32>
    %23 = arith.mulf %11, %22 : vector<128x1xf32>
    %24 = arith.addf %23, %17 : vector<128x1xf32>
    %c0_15 = arith.constant 0 : index
    %c0_16 = arith.constant 0 : index
    %25 = vector.load %arg8[%c0_15, %c0_16] : memref<128x1xf32, #tpu.memory_space<vmem>>, vector<128x1xf32>
    tpu.vector_store %arg8[%c0_15, %c0_16], %24 {strides = array<i32>} : memref<128x1xf32, #tpu.memory_space<vmem>>, vector<128x1xf32>,
    %c0_17 = arith.constant 0 : index
    %c0_18 = arith.constant 0 : index
    %26 = vector.load %arg9[%c0_17, %c0_18] : memref<128x1xf32, #tpu.memory_space<vmem>>, vector<128x1xf32>
    %27 = arith.mulf %11, %26 : vector<128x1xf32>
    %28 = arith.addf %27, %21 : vector<128x1xf32>
    %c0_19 = arith.constant 0 : index
    %c0_20 = arith.constant 0 : index
    %29 = vector.load %arg9[%c0_19, %c0_20] : memref<128x1xf32, #tpu.memory_space<vmem>>, vector<128x1xf32>
    tpu.vector_store %arg9[%c0_19, %c0_20], %28 {strides = array<i32>} : memref<128x1xf32, #tpu.memory_space<vmem>>, vector<128x1xf32>,
    %c0_21 = arith.constant 0 : index
    %c0_22 = arith.constant 0 : index
    %30 = vector.load %arg7[%c0_21, %c0_22] : memref<128x1xf32, #tpu.memory_space<vmem>>, vector<128x1xf32>
    tpu.vector_store %arg7[%c0_21, %c0_22], %9 {strides = array<i32>} : memref<128x1xf32, #tpu.memory_space<vmem>>, vector<128x1xf32>,
    %c1_i32 = arith.constant 1 : i32
    %31 = arith.cmpi eq, %arg1, %c1_i32 : i32
    %32 = arith.extui %31 : i1 to i32
    %c0_i32_23 = arith.constant 0 : i32
    %33 = arith.cmpi ne, %32, %c0_i32_23 : i32
    scf.if %33 {
      %c0_24 = arith.constant 0 : index
      %c0_25 = arith.constant 0 : index
      %34 = vector.load %arg9[%c0_24, %c0_25] : memref<128x1xf32, #tpu.memory_space<vmem>>, vector<128x1xf32>
      %c0_26 = arith.constant 0 : index
      %c0_27 = arith.constant 0 : index
      %35 = vector.load %arg8[%c0_26, %c0_27] : memref<128x1xf32, #tpu.memory_space<vmem>>, vector<128x1xf32>
      %36 = tpu.reciprocal %35 {approx = true} : vector<128x1xf32> -> vector<128x1xf32>
      %37 = arith.mulf %34, %36 : vector<128x1xf32>
      %c0_28 = arith.constant 0 : index
      %c0_29 = arith.constant 0 : index
      %38 = vector.load %arg6[%c0_28, %c0_29] : memref<128x1xf32, #tpu.memory_space<vmem>>, vector<128x1xf32>
      tpu.vector_store %arg6[%c0_28, %c0_29], %37 {strides = array<i32>} : memref<128x1xf32, #tpu.memory_space<vmem>>, vector<128x1xf32>,
    } else {
    }
    return
  }
  func.func @transform_0(%arg0: i32, %arg1: i32) -> (i32, i32) {
    %c0_i32 = arith.constant 0 : i32
    %c0_i32_0 = arith.constant 0 : i32
    return %arg0, %c0_i32 : i32, i32
  }
  func.func @transform_1(%arg0: i32, %arg1: i32) -> (i32, i32) {
    %c0_i32 = arith.constant 0 : i32
    %c0_i32_0 = arith.constant 0 : i32
    return %arg0, %c0_i32 : i32, i32
  }
  func.func @transform_2(%arg0: i32, %arg1: i32) -> (i32, i32) {
    %c0_i32 = arith.constant 0 : i32
    %c0_i32_0 = arith.constant 0 : i32
    return %arg1, %c0_i32 : i32, i32
  }
  func.func @transform_3(%arg0: i32, %arg1: i32) -> (i32, i32) {
    %c0_i32 = arith.constant 0 : i32
    %c0_i32_0 = arith.constant 0 : i32
    return %arg1, %c0_i32 : i32, i32
  }
  func.func @transform_4(%arg0: i32, %arg1: i32) -> (i32, i32) {
    %c0_i32 = arith.constant 0 : i32
    %c0_i32_0 = arith.constant 0 : i32
    return %arg0, %c0_i32 : i32, i32
  }
}

</mosaic_0001>

<llo_original>
// kernel: tpu_custom_call.1
$region0: #{tpu_custom_call.1}
  #allocation0 [shape = 'u32[]', space=smem, size = 0x4, offset = 0x4, fixed_abs, tag = 'smem constant byte address 0x4 - core index']
  #allocation1 [shape = 'u32[144,128]{1,0:T(1,128)}', space=vmem, size = 0x12000, scoped, tag = 'internal scratch']
  #allocation2 [shape = 'f32[128,1]{1,0:T(8,128)}', space=vmem, size = 0x10000, scoped, tag = 'scratch operand']
  #allocation3 [shape = 'f32[128,1]{1,0:T(8,128)}', space=vmem, size = 0x10000, scoped, tag = 'scratch operand']
  #allocation4 [shape = 'f32[128,1]{1,0:T(8,128)}', space=vmem, size = 0x10000, scoped, tag = 'scratch operand']
  %s0 = inlined_call_operand.vmem [shape: f32[256,128], index: 0, kind: input, shape index: {}]
  %s1 = inlined_call_operand.vmem [shape: f32[256,64], index: 1, kind: input, shape index: {}]
  %s2 = inlined_call_operand.vmem [shape: f32[256,64], index: 2, kind: input, shape index: {}]
  %s3 = inlined_call_operand.vmem [shape: f32[256,128], index: 3, kind: input, shape index: {}]
  %s4 = inlined_call_operand.vmem [shape: f32[256,1], index: 4, kind: output, shape index: {}]
  %s5 = sld [smem:[#allocation0]]
  $region57: #{tpu_custom_call.1} parent=0
    _
  %s7 = ssub.s32 1, %s5
  %s8 = scalar_select 0, %s7, %s5
  loop: start=0, step=1, limit=6
  $region2: #{tpu_custom_call.1} parent=0 // loop_pre_header
    _
  $region3: #{tpu_custom_call.1} parent=0 // loop_header
    %s10 = sphi 0, %s14
    %p11 = scmp.ge.s32.totalorder %s10, 6
    %s17 = sphi 0, %s29
    %s18 = sphi 0, %s25
    %s19 = sphi 0, %s17
    %s20 = sphi 0, %s18
    %s21 = sphi 0, %s19
    %s22 = sphi 0, %s20
    %s32 = sphi 0, %s34
    %s35 = sphi 0, %s32
    %s36 = sphi 0, %s35
    %s52 = sphi 0, %s36
    %s58 = sphi 0, %s60
    %s61 = sphi 0, %s58
    %s62 = sphi 0, %s61
    %s78 = sphi 0, %s62
    %s84 = sphi 0, %s86
    %s87 = sphi 0, %s84
    %s88 = sphi 0, %s87
    %s104 = sphi 0, %s88
    %s110 = sphi 0, %s112
    %s113 = sphi 0, %s110
    %s114 = sphi 0, %s113
    %s130 = sphi 0, %s114
    %s136 = sphi 0, %s138
    %s139 = sphi 0, %s136
    %s140 = sphi 0, %s139
    %s156 = sphi 0, %s140
  $region4: #{tpu_custom_call.1} parent=0 // loop_header_branch
    %13 = sbr.rel (%p11) target = $region8
  $region5: #{tpu_custom_call.1} parent=0 // loop_body
    %s15 = ssub.s32 %s10, 1
    %s16 = ssub.s32 %s10, 2
    %s23 = sadd.s32 1, %s18
    %p24 = scmp.ge.s32.totalorder %s23, 2
    %s25 = scalar_select %p24, 0, %s23
    %s26 = sadd.s32 1, %s17
    %s27 = scalar_select %p24, %s26, %s17
    %p28 = scmp.ge.s32.totalorder %s27, 2
    %s29 = scalar_select %p28, 0, %s27
    %s30 = ssub.s32 %s17, %s29
    %p31 = scmp.eq.s32.totalorder %s30, 0
    %s33 = sadd.s32 %s32, 1
    %s34 = scalar_select %p31, %s32, %s33
    %p37 = pneg %p31
    %p38 = scmp.eq.s32.totalorder %s10, 3
    %p39 = por %p37, %p38
    %p40 = scmp.ne.s32.totalorder %s32, %s35
    %p41 = scmp.eq.s32.totalorder %s10, 0
    %p42 = por %p40, %p41
    %p43 = scmp.ne.s32.totalorder %s32, %s35
    %p44 = scmp.eq.s32.totalorder %s15, 3
    %p45 = por %p43, %p44
    %p46 = scmp.ne.s32.totalorder %s35, %s36
    %p47 = scmp.eq.s32.totalorder %s15, 0
    %p48 = por %p46, %p47
    %p49 = scmp.ne.s32.totalorder %s35, %s36
    %p50 = scmp.eq.s32.totalorder %s16, 3
    %p51 = por %p49, %p50
    %p53 = scmp.ne.s32.totalorder %s36, %s52
    %p54 = scmp.eq.s32.totalorder %s16, 0
    %p55 = por %p53, %p54
    %s56 = ssub.s32 %s17, %s29
    %p57 = scmp.eq.s32.totalorder %s56, 0
    %s59 = sadd.s32 %s58, 1
    %s60 = scalar_select %p57, %s58, %s59
    %p63 = pneg %p57
    %p64 = scmp.eq.s32.totalorder %s10, 3
    %p65 = por %p63, %p64
    %p66 = scmp.ne.s32.totalorder %s58, %s61
    %p67 = scmp.eq.s32.totalorder %s10, 0
    %p68 = por %p66, %p67
    %p69 = scmp.ne.s32.totalorder %s58, %s61
    %p70 = scmp.eq.s32.totalorder %s15, 3
    %p71 = por %p69, %p70
    %p72 = scmp.ne.s32.totalorder %s61, %s62
    %p73 = scmp.eq.s32.totalorder %s15, 0
    %p74 = por %p72, %p73
    %p75 = scmp.ne.s32.totalorder %s61, %s62
    %p76 = scmp.eq.s32.totalorder %s16, 3
    %p77 = por %p75, %p76
    %p79 = scmp.ne.s32.totalorder %s62, %s78
    %p80 = scmp.eq.s32.totalorder %s16, 0
    %p81 = por %p79, %p80
    %s82 = ssub.s32 %s18, %s25
    %p83 = scmp.eq.s32.totalorder %s82, 0
    %s85 = sadd.s32 %s84, 1
    %s86 = scalar_select %p83, %s84, %s85
    %p89 = pneg %p83
    %p90 = scmp.eq.s32.totalorder %s10, 3
    %p91 = por %p89, %p90
    %p92 = scmp.ne.s32.totalorder %s84, %s87
    %p93 = scmp.eq.s32.totalorder %s10, 0
    %p94 = por %p92, %p93
    %p95 = scmp.ne.s32.totalorder %s84, %s87
    %p96 = scmp.eq.s32.totalorder %s15, 3
    %p97 = por %p95, %p96
    %p98 = scmp.ne.s32.totalorder %s87, %s88
    %p99 = scmp.eq.s32.totalorder %s15, 0
    %p100 = por %p98, %p99
    %p101 = scmp.ne.s32.totalorder %s87, %s88
    %p102 = scmp.eq.s32.totalorder %s16, 3
    %p103 = por %p101, %p102
    %p105 = scmp.ne.s32.totalorder %s88, %s104
    %p106 = scmp.eq.s32.totalorder %s16, 0
    %p107 = por %p105, %p106
    %s108 = ssub.s32 %s18, %s25
    %p109 = scmp.eq.s32.totalorder %s108, 0
    %s111 = sadd.s32 %s110, 1
    %s112 = scalar_select %p109, %s110, %s111
    %p115 = pneg %p109
    %p116 = scmp.eq.s32.totalorder %s10, 3
    %p117 = por %p115, %p116
    %p118 = scmp.ne.s32.totalorder %s110, %s113
    %p119 = scmp.eq.s32.totalorder %s10, 0
    %p120 = por %p118, %p119
    %p121 = scmp.ne.s32.totalorder %s110, %s113
    %p122 = scmp.eq.s32.totalorder %s15, 3
    %p123 = por %p121, %p122
    %p124 = scmp.ne.s32.totalorder %s113, %s114
    %p125 = scmp.eq.s32.totalorder %s15, 0
    %p126 = por %p124, %p125
    %p127 = scmp.ne.s32.totalorder %s113, %s114
    %p128 = scmp.eq.s32.totalorder %s16, 3
    %p129 = por %p127, %p128
    %p131 = scmp.ne.s32.totalorder %s114, %s130
    %p132 = scmp.eq.s32.totalorder %s16, 0
    %p133 = por %p131, %p132
    %s134 = ssub.s32 %s17, %s29
    %p135 = scmp.eq.s32.totalorder %s134, 0
    %s137 = sadd.s32 %s136, 1
    %s138 = scalar_select %p135, %s136, %s137
    %p141 = pneg %p135
    %p142 = scmp.eq.s32.totalorder %s10, 3
    %p143 = por %p141, %p142
    %p144 = scmp.ne.s32.totalorder %s136, %s139
    %p145 = scmp.eq.s32.totalorder %s10, 0
    %p146 = por %p144, %p145
    %p147 = scmp.ne.s32.totalorder %s136, %s139
    %p148 = scmp.eq.s32.totalorder %s15, 3
    %p149 = por %p147, %p148
    %p150 = scmp.ne.s32.totalorder %s139, %s140
    %p151 = scmp.eq.s32.totalorder %s15, 0
    %p152 = por %p150, %p151
    %p153 = scmp.ne.s32.totalorder %s139, %s140
    %p154 = scmp.eq.s32.totalorder %s16, 3
    %p155 = por %p153, %p154
    %p157 = scmp.ne.s32.totalorder %s140, %s156
    %p158 = scmp.eq.s32.totalorder %s16, 0
    %p159 = por %p157, %p158
    %p160 = scmp.le.s32.totalorder 1, %s10
    %p161 = scmp.lt.s32.totalorder %s10, 5
    %p162 = pnand %p160, %p161
    %p163 = pneg %p162
    // Predicated region
    $region9: #{tpu_custom_call.1} parent=5 // pred_check
      _
    $region10: #{tpu_custom_call.1} parent=5 // pred_check_branch
      %165 = sbr.rel (%p162) target = $region12
    $region11: #{tpu_custom_call.1} parent=5 // pred_region
      %s166 = ssub.s32 %s10, 1
    $region12: #{tpu_custom_call.1} parent=5 // pred_fallthru
      _
    %p167 = scmp.lt.s32.totalorder %s10, 4
    // Predicated region
    $region13: #{tpu_custom_call.1} parent=5 // pred_check
      %p168 = pneg %p167
    $region14: #{tpu_custom_call.1} parent=5 // pred_check_branch
      %170 = sbr.rel (%p168) target = $region16
    $region15: #{tpu_custom_call.1} parent=5 // pred_region
      // Predicated region
      $region17: #{tpu_custom_call.1} parent=15 // pred_check
        %p171 = pneg %p42
      $region18: #{tpu_custom_call.1} parent=15 // pred_check_branch
        %173 = sbr.rel (%p171) target = $region20
      $region19: #{tpu_custom_call.1} parent=15 // pred_region
        %s174 = smul.u32 16, %s17
        %p175 = scmp.lt.s32.totalorder %s174, 31
        %s176 = scalar_select %p175, %s174, 31
        %s177 = smul.addr %s176, 8
        %s178 = scalar_lea.vmem %s0, %s177
        %s179 = smul.u32 16, %s17
      $region20: #{tpu_custom_call.1} parent=15 // pred_fallthru
        _
      // Predicated region
      $region21: #{tpu_custom_call.1} parent=15 // pred_check
        %p180 = pneg %p68
      $region22: #{tpu_custom_call.1} parent=15 // pred_check_branch
        %182 = sbr.rel (%p180) target = $region24
      $region23: #{tpu_custom_call.1} parent=15 // pred_region
        %s183 = smul.u32 16, %s17
        %p184 = scmp.lt.s32.totalorder %s183, 31
        %s185 = scalar_select %p184, %s183, 31
        %s186 = smul.addr %s185, 8
        %s187 = scalar_lea.vmem %s1, %s186
        %s188 = smul.u32 16, %s17
      $region24: #{tpu_custom_call.1} parent=15 // pred_fallthru
        _
      // Predicated region
      $region25: #{tpu_custom_call.1} parent=15 // pred_check
        %p189 = pneg %p94
      $region26: #{tpu_custom_call.1} parent=15 // pred_check_branch
        %191 = sbr.rel (%p189) target = $region28
      $region27: #{tpu_custom_call.1} parent=15 // pred_region
        %s192 = smul.u32 16, %s18
        %p193 = scmp.lt.s32.totalorder %s192, 31
        %s194 = scalar_select %p193, %s192, 31
        %s195 = smul.addr %s194, 8
        %s196 = scalar_lea.vmem %s2, %s195
        %s197 = smul.u32 16, %s18
      $region28: #{tpu_custom_call.1} parent=15 // pred_fallthru
        _
      // Predicated region
      $region29: #{tpu_custom_call.1} parent=15 // pred_check
        %p198 = pneg %p120
      $region30: #{tpu_custom_call.1} parent=15 // pred_check_branch
        %200 = sbr.rel (%p198) target = $region32
      $region31: #{tpu_custom_call.1} parent=15 // pred_region
        %s201 = smul.u32 16, %s18
        %p202 = scmp.lt.s32.totalorder %s201, 31
        %s203 = scalar_select %p202, %s201, 31
        %s204 = smul.addr %s203, 8
        %s205 = scalar_lea.vmem %s3, %s204
        %s206 = smul.u32 16, %s18
      $region32: #{tpu_custom_call.1} parent=15 // pred_fallthru
        _
    $region16: #{tpu_custom_call.1} parent=5 // pred_fallthru
      _
    %p207 = scmp.le.s32.totalorder 1, %s10
    %p208 = scmp.lt.s32.totalorder %s10, 5
    %p209 = pnand %p207, %p208
    %p210 = pneg %p209
    // Predicated region
    $region33: #{tpu_custom_call.1} parent=5 // pred_check
      _
    $region34: #{tpu_custom_call.1} parent=5 // pred_check_branch
      %212 = sbr.rel (%p209) target = $region36
    $region35: #{tpu_custom_call.1} parent=5 // pred_region
      %s213 = ssub.s32 %s10, 1
      %s214 = smul.u32 16, %s19
      %p215 = scmp.lt.s32.totalorder %s214, 31
      %s216 = scalar_select %p215, %s214, 31
      %s217 = smul.addr %s216, 8
      %s218 = scalar_lea.vmem %s0, %s217
      %p219 = pneg %p48
      %p220 = pneg %p45
      %s221 = smul.u32 16, %s19
      %p222 = scmp.lt.s32.totalorder %s221, 31
      %s223 = scalar_select %p222, %s221, 31
      %s224 = smul.addr %s223, 8
      %s225 = scalar_lea.vmem %s1, %s224
      %p226 = pneg %p74
      %p227 = pneg %p71
      %s228 = smul.u32 16, %s20
      %p229 = scmp.lt.s32.totalorder %s228, 31
      %s230 = scalar_select %p229, %s228, 31
      %s231 = smul.addr %s230, 8
      %s232 = scalar_lea.vmem %s2, %s231
      %p233 = pneg %p100
      %p234 = pneg %p97
      %s235 = smul.u32 16, %s20
      %p236 = scmp.lt.s32.totalorder %s235, 31
      %s237 = scalar_select %p236, %s235, 31
      %s238 = smul.addr %s237, 8
      %s239 = scalar_lea.vmem %s3, %s238
      %p240 = pneg %p126
      %p241 = pneg %p123
      %p242 = pneg %p152
      %p243 = pneg %p149
      %s244 = smul.u32 16, %s19
      %p245 = scmp.lt.s32.totalorder %s244, 31
      %s246 = scalar_select %p245, %s244, 31
      %s247 = smul.addr %s246, 8
      %s248 = scalar_lea.vmem %s4, %s247
      %s249 = smul.u32 16, %s19
      %p250 = scmp.lt.s32.totalorder %s249, 31
      %s251 = scalar_select %p250, %s249, 31
      %s252 = smul.addr %s251, 8
      %s253 = scalar_lea.vmem %s0, %s252
      %s254 = smul.u32 16, %s19
      %s255 = smul.u32 16, %s19
      %p256 = scmp.lt.s32.totalorder %s255, 31
      %s257 = scalar_select %p256, %s255, 31
      %s258 = smul.addr %s257, 8
      %s259 = scalar_lea.vmem %s1, %s258
      %s260 = smul.u32 16, %s19
      %s261 = smul.u32 16, %s20
      %p262 = scmp.lt.s32.totalorder %s261, 31
      %s263 = scalar_select %p262, %s261, 31
      %s264 = smul.addr %s263, 8
      %s265 = scalar_lea.vmem %s2, %s264
      %s266 = smul.u32 16, %s20
      %s267 = smul.u32 16, %s20
      %p268 = scmp.lt.s32.totalorder %s267, 31
      %s269 = scalar_select %p268, %s267, 31
      %s270 = smul.addr %s269, 8
      %s271 = scalar_lea.vmem %s3, %s270
      %s272 = smul.u32 16, %s20
      %s273 = smul.u32 16, %s19
      %p274 = scmp.lt.s32.totalorder %s273, 31
      %s275 = scalar_select %p274, %s273, 31
      %s276 = smul.addr %s275, 8
      %s277 = scalar_lea.vmem %s4, %s276
      %s278 = smul.u32 16, %s19
      %p279 = scmp.eq.s32.totalorder %s20, 0
      // Predicated region
      $region37: #{tpu_custom_call.1} parent=35 // pred_check
        %p280 = pneg %p279
      $region38: #{tpu_custom_call.1} parent=35 // pred_check_branch
        %282 = sbr.rel (%p280) target = $region40
      $region39: #{tpu_custom_call.1} parent=35 // pred_region
        %vm283 = vcmask 7168
        %284 = vst.msk [vmem:[#allocation2] sm:$0xff] %vm283, -1e+30
        %285 = vst.msk [vmem:[#allocation2 + $0x8] sm:$0xff] %vm283, -1e+30
        %286 = vst.msk [vmem:[#allocation2 + $0x10] sm:$0xff] %vm283, -1e+30
        %287 = vst.msk [vmem:[#allocation2 + $0x18] sm:$0xff] %vm283, -1e+30
        %288 = vst.msk [vmem:[#allocation2 + $0x20] sm:$0xff] %vm283, -1e+30
        %289 = vst.msk [vmem:[#allocation2 + $0x28] sm:$0xff] %vm283, -1e+30
        %290 = vst.msk [vmem:[#allocation2 + $0x30] sm:$0xff] %vm283, -1e+30
        %291 = vst.msk [vmem:[#allocation2 + $0x38] sm:$0xff] %vm283, -1e+30
        %292 = vst.msk [vmem:[#allocation2 + $0x40] sm:$0xff] %vm283, -1e+30
        %293 = vst.msk [vmem:[#allocation2 + $0x48] sm:$0xff] %vm283, -1e+30
        %294 = vst.msk [vmem:[#allocation2 + $0x50] sm:$0xff] %vm283, -1e+30
        %295 = vst.msk [vmem:[#allocation2 + $0x58] sm:$0xff] %vm283, -1e+30
        %296 = vst.msk [vmem:[#allocation2 + $0x60] sm:$0xff] %vm283, -1e+30
        %297 = vst.msk [vmem:[#allocation2 + $0x68] sm:$0xff] %vm283, -1e+30
        %298 = vst.msk [vmem:[#allocation2 + $0x70] sm:$0xff] %vm283, -1e+30
        %299 = vst.msk [vmem:[#allocation2 + $0x78] sm:$0xff] %vm283, -1e+30
        %300 = vst.msk [vmem:[#allocation3] sm:$0xff] %vm283, 0.0
        %301 = vst.msk [vmem:[#allocation3 + $0x8] sm:$0xff] %vm283, 0.0
        %302 = vst.msk [vmem:[#allocation3 + $0x10] sm:$0xff] %vm283, 0.0
        %303 = vst.msk [vmem:[#allocation3 + $0x18] sm:$0xff] %vm283, 0.0
        %304 = vst.msk [vmem:[#allocation3 + $0x20] sm:$0xff] %vm283, 0.0
        %305 = vst.msk [vmem:[#allocation3 + $0x28] sm:$0xff] %vm283, 0.0
        %306 = vst.msk [vmem:[#allocation3 + $0x30] sm:$0xff] %vm283, 0.0
        %307 = vst.msk [vmem:[#allocation3 + $0x38] sm:$0xff] %vm283, 0.0
        %308 = vst.msk [vmem:[#allocation3 + $0x40] sm:$0xff] %vm283, 0.0
        %309 = vst.msk [vmem:[#allocation3 + $0x48] sm:$0xff] %vm283, 0.0
        %310 = vst.msk [vmem:[#allocation3 + $0x50] sm:$0xff] %vm283, 0.0
        %311 = vst.msk [vmem:[#allocation3 + $0x58] sm:$0xff] %vm283, 0.0
        %312 = vst.msk [vmem:[#allocation3 + $0x60] sm:$0xff] %vm283, 0.0
        %313 = vst.msk [vmem:[#allocation3 + $0x68] sm:$0xff] %vm283, 0.0
        %314 = vst.msk [vmem:[#allocation3 + $0x70] sm:$0xff] %vm283, 0.0
        %315 = vst.msk [vmem:[#allocation3 + $0x78] sm:$0xff] %vm283, 0.0
        %316 = vst.msk [vmem:[#allocation4] sm:$0xff] %vm283, 0.0
        %317 = vst.msk [vmem:[#allocation4 + $0x8] sm:$0xff] %vm283, 0.0
        %318 = vst.msk [vmem:[#allocation4 + $0x10] sm:$0xff] %vm283, 0.0
        %319 = vst.msk [vmem:[#allocation4 + $0x18] sm:$0xff] %vm283, 0.0
        %320 = vst.msk [vmem:[#allocation4 + $0x20] sm:$0xff] %vm283, 0.0
        %321 = vst.msk [vmem:[#allocation4 + $0x28] sm:$0xff] %vm283, 0.0
        %322 = vst.msk [vmem:[#allocation4 + $0x30] sm:$0xff] %vm283, 0.0
        %323 = vst.msk [vmem:[#allocation4 + $0x38] sm:$0xff] %vm283, 0.0
        %324 = vst.msk [vmem:[#allocation4 + $0x40] sm:$0xff] %vm283, 0.0
        %325 = vst.msk [vmem:[#allocation4 + $0x48] sm:$0xff] %vm283, 0.0
        %326 = vst.msk [vmem:[#allocation4 + $0x50] sm:$0xff] %vm283, 0.0
        %327 = vst.msk [vmem:[#allocation4 + $0x58] sm:$0xff] %vm283, 0.0
        %328 = vst.msk [vmem:[#allocation4 + $0x60] sm:$0xff] %vm283, 0.0
        %329 = vst.msk [vmem:[#allocation4 + $0x68] sm:$0xff] %vm283, 0.0
        %330 = vst.msk [vmem:[#allocation4 + $0x70] sm:$0xff] %vm283, 0.0
        %331 = vst.msk [vmem:[#allocation4 + $0x78] sm:$0xff] %vm283, 0.0
      $region40: #{tpu_custom_call.1} parent=35 // pred_fallthru
        _
      %v332 = vld [vmem:[%s259] sm:$0xff]
      %v333 = vld [vmem:[%s259 + $0x8] sm:$0xff]
      %v334 = vld [vmem:[%s259 + $0x10] sm:$0xff]
      %v335 = vld [vmem:[%s259 + $0x18] sm:$0xff]
      %v336 = vld [vmem:[%s259 + $0x20] sm:$0xff]
      %v337 = vld [vmem:[%s259 + $0x28] sm:$0xff]
      %v338 = vld [vmem:[%s259 + $0x30] sm:$0xff]
      %v339 = vld [vmem:[%s259 + $0x38] sm:$0xff]
      %v340 = vld [vmem:[%s259 + $0x40] sm:$0xff]
      %v341 = vld [vmem:[%s259 + $0x48] sm:$0xff]
      %v342 = vld [vmem:[%s259 + $0x50] sm:$0xff]
      %v343 = vld [vmem:[%s259 + $0x58] sm:$0xff]
      %v344 = vld [vmem:[%s259 + $0x60] sm:$0xff]
      %v345 = vld [vmem:[%s259 + $0x68] sm:$0xff]
      %v346 = vld [vmem:[%s259 + $0x70] sm:$0xff]
      %v347 = vld [vmem:[%s259 + $0x78] sm:$0xff]
      %v348 = vld [vmem:[%s265] sm:$0xff]
      %v349 = vld [vmem:[%s265 + $0x8] sm:$0xff]
      %v350 = vld [vmem:[%s265 + $0x10] sm:$0xff]
      %v351 = vld [vmem:[%s265 + $0x18] sm:$0xff]
      %v352 = vld [vmem:[%s265 + $0x20] sm:$0xff]
      %v353 = vld [vmem:[%s265 + $0x28] sm:$0xff]
      %v354 = vld [vmem:[%s265 + $0x30] sm:$0xff]
      %v355 = vld [vmem:[%s265 + $0x38] sm:$0xff]
      %v356 = vld [vmem:[%s265 + $0x40] sm:$0xff]
      %v357 = vld [vmem:[%s265 + $0x48] sm:$0xff]
      %v358 = vld [vmem:[%s265 + $0x50] sm:$0xff]
      %v359 = vld [vmem:[%s265 + $0x58] sm:$0xff]
      %v360 = vld [vmem:[%s265 + $0x60] sm:$0xff]
      %v361 = vld [vmem:[%s265 + $0x68] sm:$0xff]
      %v362 = vld [vmem:[%s265 + $0x70] sm:$0xff]
      %v363 = vld [vmem:[%s265 + $0x78] sm:$0xff]
      %vm364 = vcmask 523264
      %v366 = vsel %vm364, %v332, 0
      %v369 = vsel %vm364, %v333, 0
      %v372 = vsel %vm364, %v334, 0
      %v375 = vsel %vm364, %v335, 0
      %v378 = vsel %vm364, %v336, 0
      %v381 = vsel %vm364, %v337, 0
      %v384 = vsel %vm364, %v338, 0
      %v387 = vsel %vm364, %v339, 0
      %v390 = vsel %vm364, %v340, 0
      %v393 = vsel %vm364, %v341, 0
      %v396 = vsel %vm364, %v342, 0
      %v399 = vsel %vm364, %v343, 0
      %v402 = vsel %vm364, %v344, 0
      %v405 = vsel %vm364, %v345, 0
      %v408 = vsel %vm364, %v346, 0
      %v411 = vsel %vm364, %v347, 0
      %v414 = vsel %vm364, %v348, 0
      %v417 = vsel %vm364, %v349, 0
      %v420 = vsel %vm364, %v350, 0
      %v423 = vsel %vm364, %v351, 0
      %v426 = vsel %vm364, %v352, 0
      %v429 = vsel %vm364, %v353, 0
      %v432 = vsel %vm364, %v354, 0
      %v435 = vsel %vm364, %v355, 0
      %v438 = vsel %vm364, %v356, 0
      %v441 = vsel %vm364, %v357, 0
      %v444 = vsel %vm364, %v358, 0
      %v447 = vsel %vm364, %v359, 0
      %v450 = vsel %vm364, %v360, 0
      %v453 = vsel %vm364, %v361, 0
      %v456 = vsel %vm364, %v362, 0
      %v459 = vsel %vm364, %v363, 0
      %461 = vmatprep.subr.mxu0 0.0
      %462 = vmatpush1.xpose.msra.mxu0 %v414
      %463 = vmatprep.subr.mxu0 0.0
      %464 = vmatpush1.xpose.msra.mxu0 %v417
      %465 = vmatprep.subr.mxu0 0.0
      %466 = vmatpush1.xpose.msra.mxu0 %v420
      %467 = vmatprep.subr.mxu0 0.0
      %468 = vmatpush1.xpose.msra.mxu0 %v423
      %469 = vmatprep.subr.mxu0 0.0
      %470 = vmatpush1.xpose.msra.mxu0 %v426
      %471 = vmatprep.subr.mxu0 0.0
      %472 = vmatpush1.xpose.msra.mxu0 %v429
      %473 = vmatprep.subr.mxu0 0.0
      %474 = vmatpush1.xpose.msra.mxu0 %v432
      %475 = vmatprep.subr.mxu0 0.0
      %476 = vmatpush1.xpose.msra.mxu0 %v435
      %477 = vmatprep.subr.mxu0 0.0
      %478 = vmatpush1.xpose.msra.mxu0 %v438
      %479 = vmatprep.subr.mxu0 0.0
      %480 = vmatpush1.xpose.msra.mxu0 %v441
      %481 = vmatprep.subr.mxu0 0.0
      %482 = vmatpush1.xpose.msra.mxu0 %v444
      %483 = vmatprep.subr.mxu0 0.0
      %484 = vmatpush1.xpose.msra.mxu0 %v447
      %485 = vmatprep.subr.mxu0 0.0
      %486 = vmatpush1.xpose.msra.mxu0 %v450
      %487 = vmatprep.subr.mxu0 0.0
      %488 = vmatpush1.xpose.msra.mxu0 %v453
      %489 = vmatprep.subr.mxu0 0.0
      %490 = vmatpush1.xpose.msra.mxu0 %v456
      %491 = vmatprep.subr.mxu0 0.0
      %492 = vmatpush1.xpose.msra.mxu0 %v459
      %493 = vmatprep.subr.mxu0 0.0
      %494 = vmatpush1.xpose.msra.mxu0 0.0
      %495 = vmatprep.subr.mxu0 0.0
      %496 = vmatpush1.xpose.msra.mxu0 0.0
      %497 = vmatprep.subr.mxu0 0.0
      %498 = vmatpush1.xpose.msra.mxu0 0.0
      %499 = vmatprep.subr.mxu0 0.0
      %500 = vmatpush1.xpose.msra.mxu0 0.0
      %501 = vmatprep.subr.mxu0 0.0
      %502 = vmatpush1.xpose.msra.mxu0 0.0
      %503 = vmatprep.subr.mxu0 0.0
      %504 = vmatpush1.xpose.msra.mxu0 0.0
      %505 = vmatprep.subr.mxu0 0.0
      %506 = vmatpush1.xpose.msra.mxu0 0.0
      %507 = vmatprep.subr.mxu0 0.0
      %508 = vmatpush1.xpose.msra.mxu0 0.0
      %509 = vmatprep.subr.mxu0 0.0
      %510 = vmatpush1.xpose.msra.mxu0 0.0
      %511 = vmatprep.subr.mxu0 0.0
      %512 = vmatpush1.xpose.msra.mxu0 0.0
      %513 = vmatprep.subr.mxu0 0.0
      %514 = vmatpush1.xpose.msra.mxu0 0.0
      %515 = vmatprep.subr.mxu0 0.0
      %516 = vmatpush1.xpose.msra.mxu0 0.0
      %517 = vmatprep.subr.mxu0 0.0
      %518 = vmatpush1.xpose.msra.mxu0 0.0
      %519 = vmatprep.subr.mxu0 0.0
      %520 = vmatpush1.xpose.msra.mxu0 0.0
      %521 = vmatprep.subr.mxu0 0.0
      %522 = vmatpush1.xpose.msra.mxu0 0.0
      %523 = vmatprep.subr.mxu0 0.0
      %524 = vmatpush1.xpose.msra.mxu0 0.0
      %525 = vmatprep.mubr.f32.mxu0 0.0
      %526 = vmatmul.mubr.f32.gmra.mrb[0].mxu0 %v366
      %v527 = vpop.f32.mrb[0].mxu0
      %v528 = vadd.f32 0.0, %v527
      %v529 = vpop.f32.mrb[0].mxu0
      %530 = vmatprep.mubr.f32.mxu0 0.0
      %531 = vmatmul.mubr.f32.gmra.mrb[0].mxu0 %v369
      %v532 = vpop.f32.mrb[0].mxu0
      %v533 = vadd.f32 0.0, %v532
      %v534 = vpop.f32.mrb[0].mxu0
      %535 = vmatprep.mubr.f32.mxu0 0.0
      %536 = vmatmul.mubr.f32.gmra.mrb[0].mxu0 %v372
      %v537 = vpop.f32.mrb[0].mxu0
      %v538 = vadd.f32 0.0, %v537
      %v539 = vpop.f32.mrb[0].mxu0
      %540 = vmatprep.mubr.f32.mxu0 0.0
      %541 = vmatmul.mubr.f32.gmra.mrb[0].mxu0 %v375
      %v542 = vpop.f32.mrb[0].mxu0
      %v543 = vadd.f32 0.0, %v542
      %v544 = vpop.f32.mrb[0].mxu0
      %545 = vmatprep.mubr.f32.mxu0 0.0
      %546 = vmatmul.mubr.f32.gmra.mrb[0].mxu0 %v378
      %v547 = vpop.f32.mrb[0].mxu0
      %v548 = vadd.f32 0.0, %v547
      %v549 = vpop.f32.mrb[0].mxu0
      %550 = vmatprep.mubr.f32.mxu0 0.0
      %551 = vmatmul.mubr.f32.gmra.mrb[0].mxu0 %v381
      %v552 = vpop.f32.mrb[0].mxu0
      %v553 = vadd.f32 0.0, %v552
      %v554 = vpop.f32.mrb[0].mxu0
      %555 = vmatprep.mubr.f32.mxu0 0.0
      %556 = vmatmul.mubr.f32.gmra.mrb[0].mxu0 %v384
      %v557 = vpop.f32.mrb[0].mxu0
      %v558 = vadd.f32 0.0, %v557
      %v559 = vpop.f32.mrb[0].mxu0
      %560 = vmatprep.mubr.f32.mxu0 0.0
      %561 = vmatmul.mubr.f32.gmra.mrb[0].mxu0 %v387
      %v562 = vpop.f32.mrb[0].mxu0
      %v563 = vadd.f32 0.0, %v562
      %v564 = vpop.f32.mrb[0].mxu0
      %565 = vmatprep.mubr.f32.mxu0 0.0
      %566 = vmatmul.mubr.f32.gmra.mrb[0].mxu0 %v390
      %v567 = vpop.f32.mrb[0].mxu0
      %v568 = vadd.f32 0.0, %v567
      %v569 = vpop.f32.mrb[0].mxu0
      %570 = vmatprep.mubr.f32.mxu0 0.0
      %571 = vmatmul.mubr.f32.gmra.mrb[0].mxu0 %v393
      %v572 = vpop.f32.mrb[0].mxu0
      %v573 = vadd.f32 0.0, %v572
      %v574 = vpop.f32.mrb[0].mxu0
      %575 = vmatprep.mubr.f32.mxu0 0.0
      %576 = vmatmul.mubr.f32.gmra.mrb[0].mxu0 %v396
      %v577 = vpop.f32.mrb[0].mxu0
      %v578 = vadd.f32 0.0, %v577
      %v579 = vpop.f32.mrb[0].mxu0
      %580 = vmatprep.mubr.f32.mxu0 0.0
      %581 = vmatmul.mubr.f32.gmra.mrb[0].mxu0 %v399
      %v582 = vpop.f32.mrb[0].mxu0
      %v583 = vadd.f32 0.0, %v582
      %v584 = vpop.f32.mrb[0].mxu0
      %585 = vmatprep.mubr.f32.mxu0 0.0
      %586 = vmatmul.mubr.f32.gmra.mrb[0].mxu0 %v402
      %v587 = vpop.f32.mrb[0].mxu0
      %v588 = vadd.f32 0.0, %v587
      %v589 = vpop.f32.mrb[0].mxu0
      %590 = vmatprep.mubr.f32.mxu0 0.0
      %591 = vmatmul.mubr.f32.gmra.mrb[0].mxu0 %v405
      %v592 = vpop.f32.mrb[0].mxu0
      %v593 = vadd.f32 0.0, %v592
      %v594 = vpop.f32.mrb[0].mxu0
      %595 = vmatprep.mubr.f32.mxu0 0.0
      %596 = vmatmul.mubr.f32.gmra.mrb[0].mxu0 %v408
      %v597 = vpop.f32.mrb[0].mxu0
      %v598 = vadd.f32 0.0, %v597
      %v599 = vpop.f32.mrb[0].mxu0
      %600 = vmatprep.mubr.f32.mxu0 0.0
      %601 = vmatmul.mubr.f32.gmra.mrb[0].mxu0 %v411
      %v602 = vpop.f32.mrb[0].mxu0
      %v603 = vadd.f32 0.0, %v602
      %v604 = vpop.f32.mrb[0].mxu0
      %605 = vdwg.mxu0
      %v606 = vld [vmem:[#allocation2] sm:$0xff]
      %v607 = vld [vmem:[#allocation2 + $0x8] sm:$0xff]
      %v608 = vld [vmem:[#allocation2 + $0x10] sm:$0xff]
      %v609 = vld [vmem:[#allocation2 + $0x18] sm:$0xff]
      %v610 = vld [vmem:[#allocation2 + $0x20] sm:$0xff]
      %v611 = vld [vmem:[#allocation2 + $0x28] sm:$0xff]
      %v612 = vld [vmem:[#allocation2 + $0x30] sm:$0xff]
      %v613 = vld [vmem:[#allocation2 + $0x38] sm:$0xff]
      %v614 = vld [vmem:[#allocation2 + $0x40] sm:$0xff]
      %v615 = vld [vmem:[#allocation2 + $0x48] sm:$0xff]
      %v616 = vld [vmem:[#allocation2 + $0x50] sm:$0xff]
      %v617 = vld [vmem:[#allocation2 + $0x58] sm:$0xff]
      %v618 = vld [vmem:[#allocation2 + $0x60] sm:$0xff]
      %v619 = vld [vmem:[#allocation2 + $0x68] sm:$0xff]
      %v620 = vld [vmem:[#allocation2 + $0x70] sm:$0xff]
      %v621 = vld [vmem:[#allocation2 + $0x78] sm:$0xff]
      %622 = vmax.xlane.f32.xlu0 %v528
      %v623 = vpop.xlane.xlu0 %622
      %624 = vmax.xlane.f32.xlu0 %v533
      %v625 = vpop.xlane.xlu0 %624
      %626 = vmax.xlane.f32.xlu0 %v538
      %v627 = vpop.xlane.xlu0 %626
      %628 = vmax.xlane.f32.xlu0 %v543
      %v629 = vpop.xlane.xlu0 %628
      %630 = vmax.xlane.f32.xlu0 %v548
      %v631 = vpop.xlane.xlu0 %630
      %632 = vmax.xlane.f32.xlu0 %v553
      %v633 = vpop.xlane.xlu0 %632
      %634 = vmax.xlane.f32.xlu0 %v558
      %v635 = vpop.xlane.xlu0 %634
      %636 = vmax.xlane.f32.xlu0 %v563
      %v637 = vpop.xlane.xlu0 %636
      %638 = vmax.xlane.f32.xlu0 %v568
      %v639 = vpop.xlane.xlu0 %638
      %640 = vmax.xlane.f32.xlu0 %v573
      %v641 = vpop.xlane.xlu0 %640
      %642 = vmax.xlane.f32.xlu0 %v578
      %v643 = vpop.xlane.xlu0 %642
      %644 = vmax.xlane.f32.xlu0 %v583
      %v645 = vpop.xlane.xlu0 %644
      %646 = vmax.xlane.f32.xlu0 %v588
      %v647 = vpop.xlane.xlu0 %646
      %648 = vmax.xlane.f32.xlu0 %v593
      %v649 = vpop.xlane.xlu0 %648
      %650 = vmax.xlane.f32.xlu0 %v598
      %v651 = vpop.xlane.xlu0 %650
      %652 = vmax.xlane.f32.xlu0 %v603
      %v653 = vpop.xlane.xlu0 %652
      %v654 = vmax.f32 %v606, %v623
      %v655 = vmax.f32 %v607, %v625
      %v656 = vmax.f32 %v608, %v627
      %v657 = vmax.f32 %v609, %v629
      %v658 = vmax.f32 %v610, %v631
      %v659 = vmax.f32 %v611, %v633
      %v660 = vmax.f32 %v612, %v635
      %v661 = vmax.f32 %v613, %v637
      %v662 = vmax.f32 %v614, %v639
      %v663 = vmax.f32 %v615, %v641
      %v664 = vmax.f32 %v616, %v643
      %v665 = vmax.f32 %v617, %v645
      %v666 = vmax.f32 %v618, %v647
      %v667 = vmax.f32 %v619, %v649
      %v668 = vmax.f32 %v620, %v651
      %v669 = vmax.f32 %v621, %v653
      %v670 = vsub.f32 %v606, %v654
      %v671 = vsub.f32 %v607, %v655
      %v672 = vsub.f32 %v608, %v656
      %v673 = vsub.f32 %v609, %v657
      %v674 = vsub.f32 %v610, %v658
      %v675 = vsub.f32 %v611, %v659
      %v676 = vsub.f32 %v612, %v660
      %v677 = vsub.f32 %v613, %v661
      %v678 = vsub.f32 %v614, %v662
      %v679 = vsub.f32 %v615, %v663
      %v680 = vsub.f32 %v616, %v664
      %v681 = vsub.f32 %v617, %v665
      %v682 = vsub.f32 %v618, %v666
      %v683 = vsub.f32 %v619, %v667
      %v684 = vsub.f32 %v620, %v668
      %v685 = vsub.f32 %v621, %v669
      %v686 = vmul.f32 %v670, 1.442695
      %v687 = vpow.pop %v686
      %v688 = vmul.f32 %v671, 1.442695
      %v689 = vpow.pop %v688
      %v690 = vmul.f32 %v672, 1.442695
      %v691 = vpow.pop %v690
      %v692 = vmul.f32 %v673, 1.442695
      %v693 = vpow.pop %v692
      %v694 = vmul.f32 %v674, 1.442695
      %v695 = vpow.pop %v694
      %v696 = vmul.f32 %v675, 1.442695
      %v697 = vpow.pop %v696
      %v698 = vmul.f32 %v676, 1.442695
      %v699 = vpow.pop %v698
      %v700 = vmul.f32 %v677, 1.442695
      %v701 = vpow.pop %v700
      %v702 = vmul.f32 %v678, 1.442695
      %v703 = vpow.pop %v702
      %v704 = vmul.f32 %v679, 1.442695
      %v705 = vpow.pop %v704
      %v706 = vmul.f32 %v680, 1.442695
      %v707 = vpow.pop %v706
      %v708 = vmul.f32 %v681, 1.442695
      %v709 = vpow.pop %v708
      %v710 = vmul.f32 %v682, 1.442695
      %v711 = vpow.pop %v710
      %v712 = vmul.f32 %v683, 1.442695
      %v713 = vpow.pop %v712
      %v714 = vmul.f32 %v684, 1.442695
      %v715 = vpow.pop %v714
      %v716 = vmul.f32 %v685, 1.442695
      %v717 = vpow.pop %v716
      %719 = vset.pattern.permute.xlu0 0
      %720 = vperm.xlu0 %719, %v654
      %v721 = vpop.permute.xlu0 %720
      %724 = vset.pattern.permute.xlu0 0
      %725 = vperm.xlu0 %724, %v655
      %v726 = vpop.permute.xlu0 %725
      %729 = vset.pattern.permute.xlu0 0
      %730 = vperm.xlu0 %729, %v656
      %v731 = vpop.permute.xlu0 %730
      %734 = vset.pattern.permute.xlu0 0
      %735 = vperm.xlu0 %734, %v657
      %v736 = vpop.permute.xlu0 %735
      %739 = vset.pattern.permute.xlu0 0
      %740 = vperm.xlu0 %739, %v658
      %v741 = vpop.permute.xlu0 %740
      %744 = vset.pattern.permute.xlu0 0
      %745 = vperm.xlu0 %744, %v659
      %v746 = vpop.permute.xlu0 %745
      %749 = vset.pattern.permute.xlu0 0
      %750 = vperm.xlu0 %749, %v660
      %v751 = vpop.permute.xlu0 %750
      %754 = vset.pattern.permute.xlu0 0
      %755 = vperm.xlu0 %754, %v661
      %v756 = vpop.permute.xlu0 %755
      %759 = vset.pattern.permute.xlu0 0
      %760 = vperm.xlu0 %759, %v662
      %v761 = vpop.permute.xlu0 %760
      %764 = vset.pattern.permute.xlu0 0
      %765 = vperm.xlu0 %764, %v663
      %v766 = vpop.permute.xlu0 %765
      %769 = vset.pattern.permute.xlu0 0
      %770 = vperm.xlu0 %769, %v664
      %v771 = vpop.permute.xlu0 %770
      %774 = vset.pattern.permute.xlu0 0
      %775 = vperm.xlu0 %774, %v665
      %v776 = vpop.permute.xlu0 %775
      %779 = vset.pattern.permute.xlu0 0
      %780 = vperm.xlu0 %779, %v666
      %v781 = vpop.permute.xlu0 %780
      %784 = vset.pattern.permute.xlu0 0
      %785 = vperm.xlu0 %784, %v667
      %v786 = vpop.permute.xlu0 %785
      %789 = vset.pattern.permute.xlu0 0
      %790 = vperm.xlu0 %789, %v668
      %v791 = vpop.permute.xlu0 %790
      %794 = vset.pattern.permute.xlu0 0
      %795 = vperm.xlu0 %794, %v669
      %v796 = vpop.permute.xlu0 %795
      %v798 = vsub.f32 %v528, %v721
      %v799 = vsub.f32 %v533, %v726
      %v800 = vsub.f32 %v538, %v731
      %v801 = vsub.f32 %v543, %v736
      %v802 = vsub.f32 %v548, %v741
      %v803 = vsub.f32 %v553, %v746
      %v804 = vsub.f32 %v558, %v751
      %v805 = vsub.f32 %v563, %v756
      %v806 = vsub.f32 %v568, %v761
      %v807 = vsub.f32 %v573, %v766
      %v808 = vsub.f32 %v578, %v771
      %v809 = vsub.f32 %v583, %v776
      %v810 = vsub.f32 %v588, %v781
      %v811 = vsub.f32 %v593, %v786
      %v812 = vsub.f32 %v598, %v791
      %v813 = vsub.f32 %v603, %v796
      %v814 = vmul.f32 %v798, 1.442695
      %v815 = vpow.pop %v814
      %v816 = vmul.f32 %v799, 1.442695
      %v817 = vpow.pop %v816
      %v818 = vmul.f32 %v800, 1.442695
      %v819 = vpow.pop %v818
      %v820 = vmul.f32 %v801, 1.442695
      %v821 = vpow.pop %v820
      %v822 = vmul.f32 %v802, 1.442695
      %v823 = vpow.pop %v822
      %v824 = vmul.f32 %v803, 1.442695
      %v825 = vpow.pop %v824
      %v826 = vmul.f32 %v804, 1.442695
      %v827 = vpow.pop %v826
      %v828 = vmul.f32 %v805, 1.442695
      %v829 = vpow.pop %v828
      %v830 = vmul.f32 %v806, 1.442695
      %v831 = vpow.pop %v830
      %v832 = vmul.f32 %v807, 1.442695
      %v833 = vpow.pop %v832
      %v834 = vmul.f32 %v808, 1.442695
      %v835 = vpow.pop %v834
      %v836 = vmul.f32 %v809, 1.442695
      %v837 = vpow.pop %v836
      %v838 = vmul.f32 %v810, 1.442695
      %v839 = vpow.pop %v838
      %v840 = vmul.f32 %v811, 1.442695
      %v841 = vpow.pop %v840
      %v842 = vmul.f32 %v812, 1.442695
      %v843 = vpow.pop %v842
      %v844 = vmul.f32 %v813, 1.442695
      %v845 = vpow.pop %v844
      %v846 = vld [vmem:[%s271] sm:$0xff]
      %v847 = vld [vmem:[%s271 + $0x8] sm:$0xff]
      %v848 = vld [vmem:[%s271 + $0x10] sm:$0xff]
      %v849 = vld [vmem:[%s271 + $0x18] sm:$0xff]
      %v850 = vld [vmem:[%s271 + $0x20] sm:$0xff]
      %v851 = vld [vmem:[%s271 + $0x28] sm:$0xff]
      %v852 = vld [vmem:[%s271 + $0x30] sm:$0xff]
      %v853 = vld [vmem:[%s271 + $0x38] sm:$0xff]
      %v854 = vld [vmem:[%s271 + $0x40] sm:$0xff]
      %v855 = vld [vmem:[%s271 + $0x48] sm:$0xff]
      %v856 = vld [vmem:[%s271 + $0x50] sm:$0xff]
      %v857 = vld [vmem:[%s271 + $0x58] sm:$0xff]
      %v858 = vld [vmem:[%s271 + $0x60] sm:$0xff]
      %v859 = vld [vmem:[%s271 + $0x68] sm:$0xff]
      %v860 = vld [vmem:[%s271 + $0x70] sm:$0xff]
      %v861 = vld [vmem:[%s271 + $0x78] sm:$0xff]
      %862 = vmatprep.subr.mxu0 0.0
      %863 = vmatpush1.msra.mxu0 %v846
      %864 = vmatprep.subr.mxu0 0.0
      %865 = vmatpush1.msra.mxu0 %v847
      %866 = vmatprep.subr.mxu0 0.0
      %867 = vmatpush1.msra.mxu0 %v848
      %868 = vmatprep.subr.mxu0 0.0
      %869 = vmatpush1.msra.mxu0 %v849
      %870 = vmatprep.subr.mxu0 0.0
      %871 = vmatpush1.msra.mxu0 %v850
      %872 = vmatprep.subr.mxu0 0.0
      %873 = vmatpush1.msra.mxu0 %v851
      %874 = vmatprep.subr.mxu0 0.0
      %875 = vmatpush1.msra.mxu0 %v852
      %876 = vmatprep.subr.mxu0 0.0
      %877 = vmatpush1.msra.mxu0 %v853
      %878 = vmatprep.subr.mxu0 0.0
      %879 = vmatpush1.msra.mxu0 %v854
      %880 = vmatprep.subr.mxu0 0.0
      %881 = vmatpush1.msra.mxu0 %v855
      %882 = vmatprep.subr.mxu0 0.0
      %883 = vmatpush1.msra.mxu0 %v856
      %884 = vmatprep.subr.mxu0 0.0
      %885 = vmatpush1.msra.mxu0 %v857
      %886 = vmatprep.subr.mxu0 0.0
      %887 = vmatpush1.msra.mxu0 %v858
      %888 = vmatprep.subr.mxu0 0.0
      %889 = vmatpush1.msra.mxu0 %v859
      %890 = vmatprep.subr.mxu0 0.0
      %891 = vmatpush1.msra.mxu0 %v860
      %892 = vmatprep.subr.mxu0 0.0
      %893 = vmatpush1.msra.mxu0 %v861
      %894 = vmatprep.subr.mxu0 0.0
      %895 = vmatpush1.msra.mxu0 0.0
      %896 = vmatprep.subr.mxu0 0.0
      %897 = vmatpush1.msra.mxu0 0.0
      %898 = vmatprep.subr.mxu0 0.0
      %899 = vmatpush1.msra.mxu0 0.0
      %900 = vmatprep.subr.mxu0 0.0
      %901 = vmatpush1.msra.mxu0 0.0
      %902 = vmatprep.subr.mxu0 0.0
      %903 = vmatpush1.msra.mxu0 0.0
      %904 = vmatprep.subr.mxu0 0.0
      %905 = vmatpush1.msra.mxu0 0.0
      %906 = vmatprep.subr.mxu0 0.0
      %907 = vmatpush1.msra.mxu0 0.0
      %908 = vmatprep.subr.mxu0 0.0
      %909 = vmatpush1.msra.mxu0 0.0
      %910 = vmatprep.subr.mxu0 0.0
      %911 = vmatpush1.msra.mxu0 0.0
      %912 = vmatprep.subr.mxu0 0.0
      %913 = vmatpush1.msra.mxu0 0.0
      %914 = vmatprep.subr.mxu0 0.0
      %915 = vmatpush1.msra.mxu0 0.0
      %916 = vmatprep.subr.mxu0 0.0
      %917 = vmatpush1.msra.mxu0 0.0
      %918 = vmatprep.subr.mxu0 0.0
      %919 = vmatpush1.msra.mxu0 0.0
      %920 = vmatprep.subr.mxu0 0.0
      %921 = vmatpush1.msra.mxu0 0.0
      %922 = vmatprep.subr.mxu0 0.0
      %923 = vmatpush1.msra.mxu0 0.0
      %924 = vmatprep.subr.mxu0 0.0
      %925 = vmatpush1.msra.mxu0 0.0
      %926 = vmatprep.mubr.f32.mxu0 0.0
      %927 = vmatmul.mubr.f32.gmra.mrb[0].mxu0 %v815
      %v928 = vpop.f32.mrb[0].mxu0
      %v929 = vadd.f32 0.0, %v928
      %v930 = vpop.f32.mrb[0].mxu0
      %931 = vmatprep.mubr.f32.mxu0 0.0
      %932 = vmatmul.mubr.f32.gmra.mrb[0].mxu0 %v817
      %v933 = vpop.f32.mrb[0].mxu0
      %v934 = vadd.f32 0.0, %v933
      %v935 = vpop.f32.mrb[0].mxu0
      %936 = vmatprep.mubr.f32.mxu0 0.0
      %937 = vmatmul.mubr.f32.gmra.mrb[0].mxu0 %v819
      %v938 = vpop.f32.mrb[0].mxu0
      %v939 = vadd.f32 0.0, %v938
      %v940 = vpop.f32.mrb[0].mxu0
      %941 = vmatprep.mubr.f32.mxu0 0.0
      %942 = vmatmul.mubr.f32.gmra.mrb[0].mxu0 %v821
      %v943 = vpop.f32.mrb[0].mxu0
      %v944 = vadd.f32 0.0, %v943
      %v945 = vpop.f32.mrb[0].mxu0
      %946 = vmatprep.mubr.f32.mxu0 0.0
      %947 = vmatmul.mubr.f32.gmra.mrb[0].mxu0 %v823
      %v948 = vpop.f32.mrb[0].mxu0
      %v949 = vadd.f32 0.0, %v948
      %v950 = vpop.f32.mrb[0].mxu0
      %951 = vmatprep.mubr.f32.mxu0 0.0
      %952 = vmatmul.mubr.f32.gmra.mrb[0].mxu0 %v825
      %v953 = vpop.f32.mrb[0].mxu0
      %v954 = vadd.f32 0.0, %v953
      %v955 = vpop.f32.mrb[0].mxu0
      %956 = vmatprep.mubr.f32.mxu0 0.0
      %957 = vmatmul.mubr.f32.gmra.mrb[0].mxu0 %v827
      %v958 = vpop.f32.mrb[0].mxu0
      %v959 = vadd.f32 0.0, %v958
      %v960 = vpop.f32.mrb[0].mxu0
      %961 = vmatprep.mubr.f32.mxu0 0.0
      %962 = vmatmul.mubr.f32.gmra.mrb[0].mxu0 %v829
      %v963 = vpop.f32.mrb[0].mxu0
      %v964 = vadd.f32 0.0, %v963
      %v965 = vpop.f32.mrb[0].mxu0
      %966 = vmatprep.mubr.f32.mxu0 0.0
      %967 = vmatmul.mubr.f32.gmra.mrb[0].mxu0 %v831
      %v968 = vpop.f32.mrb[0].mxu0
      %v969 = vadd.f32 0.0, %v968
      %v970 = vpop.f32.mrb[0].mxu0
      %971 = vmatprep.mubr.f32.mxu0 0.0
      %972 = vmatmul.mubr.f32.gmra.mrb[0].mxu0 %v833
      %v973 = vpop.f32.mrb[0].mxu0
      %v974 = vadd.f32 0.0, %v973
      %v975 = vpop.f32.mrb[0].mxu0
      %976 = vmatprep.mubr.f32.mxu0 0.0
      %977 = vmatmul.mubr.f32.gmra.mrb[0].mxu0 %v835
      %v978 = vpop.f32.mrb[0].mxu0
      %v979 = vadd.f32 0.0, %v978
      %v980 = vpop.f32.mrb[0].mxu0
      %981 = vmatprep.mubr.f32.mxu0 0.0
      %982 = vmatmul.mubr.f32.gmra.mrb[0].mxu0 %v837
      %v983 = vpop.f32.mrb[0].mxu0
      %v984 = vadd.f32 0.0, %v983
      %v985 = vpop.f32.mrb[0].mxu0
      %986 = vmatprep.mubr.f32.mxu0 0.0
      %987 = vmatmul.mubr.f32.gmra.mrb[0].mxu0 %v839
      %v988 = vpop.f32.mrb[0].mxu0
      %v989 = vadd.f32 0.0, %v988
      %v990 = vpop.f32.mrb[0].mxu0
      %991 = vmatprep.mubr.f32.mxu0 0.0
      %992 = vmatmul.mubr.f32.gmra.mrb[0].mxu0 %v841
      %v993 = vpop.f32.mrb[0].mxu0
      %v994 = vadd.f32 0.0, %v993
      %v995 = vpop.f32.mrb[0].mxu0
      %996 = vmatprep.mubr.f32.mxu0 0.0
      %997 = vmatmul.mubr.f32.gmra.mrb[0].mxu0 %v843
      %v998 = vpop.f32.mrb[0].mxu0
      %v999 = vadd.f32 0.0, %v998
      %v1000 = vpop.f32.mrb[0].mxu0
      %1001 = vmatprep.mubr.f32.mxu0 0.0
      %1002 = vmatmul.mubr.f32.gmra.mrb[0].mxu0 %v845
      %v1003 = vpop.f32.mrb[0].mxu0
      %v1004 = vadd.f32 0.0, %v1003
      %v1005 = vpop.f32.mrb[0].mxu0
      %1006 = vdwg.mxu0
      %v1007 = vld [vmem:[%s253] sm:$0xff]
      %v1008 = vld [vmem:[%s253 + $0x8] sm:$0xff]
      %v1009 = vld [vmem:[%s253 + $0x10] sm:$0xff]
      %v1010 = vld [vmem:[%s253 + $0x18] sm:$0xff]
      %v1011 = vld [vmem:[%s253 + $0x20] sm:$0xff]
      %v1012 = vld [vmem:[%s253 + $0x28] sm:$0xff]
      %v1013 = vld [vmem:[%s253 + $0x30] sm:$0xff]
      %v1014 = vld [vmem:[%s253 + $0x38] sm:$0xff]
      %v1015 = vld [vmem:[%s253 + $0x40] sm:$0xff]
      %v1016 = vld [vmem:[%s253 + $0x48] sm:$0xff]
      %v1017 = vld [vmem:[%s253 + $0x50] sm:$0xff]
      %v1018 = vld [vmem:[%s253 + $0x58] sm:$0xff]
      %v1019 = vld [vmem:[%s253 + $0x60] sm:$0xff]
      %v1020 = vld [vmem:[%s253 + $0x68] sm:$0xff]
      %v1021 = vld [vmem:[%s253 + $0x70] sm:$0xff]
      %v1022 = vld [vmem:[%s253 + $0x78] sm:$0xff]
      %v1023 = vmul.f32 %v1007, %v929
      %v1024 = vmul.f32 %v1008, %v934
      %v1025 = vmul.f32 %v1009, %v939
      %v1026 = vmul.f32 %v1010, %v944
      %v1027 = vmul.f32 %v1011, %v949
      %v1028 = vmul.f32 %v1012, %v954
      %v1029 = vmul.f32 %v1013, %v959
      %v1030 = vmul.f32 %v1014, %v964
      %v1031 = vmul.f32 %v1015, %v969
      %v1032 = vmul.f32 %v1016, %v974
      %v1033 = vmul.f32 %v1017, %v979
      %v1034 = vmul.f32 %v1018, %v984
      %v1035 = vmul.f32 %v1019, %v989
      %v1036 = vmul.f32 %v1020, %v994
      %v1037 = vmul.f32 %v1021, %v999
      %v1038 = vmul.f32 %v1022, %v1004
      %1039 = vadd.xlane.f32.xlu0 %v1023
      %v1040 = vpop.xlane.xlu0 %1039
      %1041 = vadd.xlane.f32.xlu0 %v1024
      %v1042 = vpop.xlane.xlu0 %1041
      %1043 = vadd.xlane.f32.xlu0 %v1025
      %v1044 = vpop.xlane.xlu0 %1043
      %1045 = vadd.xlane.f32.xlu0 %v1026
      %v1046 = vpop.xlane.xlu0 %1045
      %1047 = vadd.xlane.f32.xlu0 %v1027
      %v1048 = vpop.xlane.xlu0 %1047
      %1049 = vadd.xlane.f32.xlu0 %v1028
      %v1050 = vpop.xlane.xlu0 %1049
      %1051 = vadd.xlane.f32.xlu0 %v1029
      %v1052 = vpop.xlane.xlu0 %1051
      %1053 = vadd.xlane.f32.xlu0 %v1030
      %v1054 = vpop.xlane.xlu0 %1053
      %1055 = vadd.xlane.f32.xlu0 %v1031
      %v1056 = vpop.xlane.xlu0 %1055
      %1057 = vadd.xlane.f32.xlu0 %v1032
      %v1058 = vpop.xlane.xlu0 %1057
      %1059 = vadd.xlane.f32.xlu0 %v1033
      %v1060 = vpop.xlane.xlu0 %1059
      %1061 = vadd.xlane.f32.xlu0 %v1034
      %v1062 = vpop.xlane.xlu0 %1061
      %1063 = vadd.xlane.f32.xlu0 %v1035
      %v1064 = vpop.xlane.xlu0 %1063
      %1065 = vadd.xlane.f32.xlu0 %v1036
      %v1066 = vpop.xlane.xlu0 %1065
      %1067 = vadd.xlane.f32.xlu0 %v1037
      %v1068 = vpop.xlane.xlu0 %1067
      %1069 = vadd.xlane.f32.xlu0 %v1038
      %v1070 = vpop.xlane.xlu0 %1069
      %v1071 = vld [vmem:[#allocation3] sm:$0xff]
      %v1072 = vld [vmem:[#allocation3 + $0x8] sm:$0xff]
      %v1073 = vld [vmem:[#allocation3 + $0x10] sm:$0xff]
      %v1074 = vld [vmem:[#allocation3 + $0x18] sm:$0xff]
      %v1075 = vld [vmem:[#allocation3 + $0x20] sm:$0xff]
      %v1076 = vld [vmem:[#allocation3 + $0x28] sm:$0xff]
      %v1077 = vld [vmem:[#allocation3 + $0x30] sm:$0xff]
      %v1078 = vld [vmem:[#allocation3 + $0x38] sm:$0xff]
      %v1079 = vld [vmem:[#allocation3 + $0x40] sm:$0xff]
      %v1080 = vld [vmem:[#allocation3 + $0x48] sm:$0xff]
      %v1081 = vld [vmem:[#allocation3 + $0x50] sm:$0xff]
      %v1082 = vld [vmem:[#allocation3 + $0x58] sm:$0xff]
      %v1083 = vld [vmem:[#allocation3 + $0x60] sm:$0xff]
      %v1084 = vld [vmem:[#allocation3 + $0x68] sm:$0xff]
      %v1085 = vld [vmem:[#allocation3 + $0x70] sm:$0xff]
      %v1086 = vld [vmem:[#allocation3 + $0x78] sm:$0xff]
      %v1087 = vmul.f32 %v687, %v1071
      %v1088 = vmul.f32 %v689, %v1072
      %v1089 = vmul.f32 %v691, %v1073
      %v1090 = vmul.f32 %v693, %v1074
      %v1091 = vmul.f32 %v695, %v1075
      %v1092 = vmul.f32 %v697, %v1076
      %v1093 = vmul.f32 %v699, %v1077
      %v1094 = vmul.f32 %v701, %v1078
      %v1095 = vmul.f32 %v703, %v1079
      %v1096 = vmul.f32 %v705, %v1080
      %v1097 = vmul.f32 %v707, %v1081
      %v1098 = vmul.f32 %v709, %v1082
      %v1099 = vmul.f32 %v711, %v1083
      %v1100 = vmul.f32 %v713, %v1084
      %v1101 = vmul.f32 %v715, %v1085
      %v1102 = vmul.f32 %v717, %v1086
      %v1103 = vadd.f32 %v1087, %v929
      %v1104 = vadd.f32 %v1088, %v934
      %v1105 = vadd.f32 %v1089, %v939
      %v1106 = vadd.f32 %v1090, %v944
      %v1107 = vadd.f32 %v1091, %v949
      %v1108 = vadd.f32 %v1092, %v954
      %v1109 = vadd.f32 %v1093, %v959
      %v1110 = vadd.f32 %v1094, %v964
      %v1111 = vadd.f32 %v1095, %v969
      %v1112 = vadd.f32 %v1096, %v974
      %v1113 = vadd.f32 %v1097, %v979
      %v1114 = vadd.f32 %v1098, %v984
      %v1115 = vadd.f32 %v1099, %v989
      %v1116 = vadd.f32 %v1100, %v994
      %v1117 = vadd.f32 %v1101, %v999
      %v1118 = vadd.f32 %v1102, %v1004
      %vm1119 = vcmask 7168
      %1120 = vst.msk [vmem:[#allocation3] sm:$0xff] %vm1119, %v1103
      %1121 = vst.msk [vmem:[#allocation3 + $0x8] sm:$0xff] %vm1119, %v1104
      %1122 = vst.msk [vmem:[#allocation3 + $0x10] sm:$0xff] %vm1119, %v1105
      %1123 = vst.msk [vmem:[#allocation3 + $0x18] sm:$0xff] %vm1119, %v1106
      %1124 = vst.msk [vmem:[#allocation3 + $0x20] sm:$0xff] %vm1119, %v1107
      %1125 = vst.msk [vmem:[#allocation3 + $0x28] sm:$0xff] %vm1119, %v1108
      %1126 = vst.msk [vmem:[#allocation3 + $0x30] sm:$0xff] %vm1119, %v1109
      %1127 = vst.msk [vmem:[#allocation3 + $0x38] sm:$0xff] %vm1119, %v1110
      %1128 = vst.msk [vmem:[#allocation3 + $0x40] sm:$0xff] %vm1119, %v1111
      %1129 = vst.msk [vmem:[#allocation3 + $0x48] sm:$0xff] %vm1119, %v1112
      %1130 = vst.msk [vmem:[#allocation3 + $0x50] sm:$0xff] %vm1119, %v1113
      %1131 = vst.msk [vmem:[#allocation3 + $0x58] sm:$0xff] %vm1119, %v1114
      %1132 = vst.msk [vmem:[#allocation3 + $0x60] sm:$0xff] %vm1119, %v1115
      %1133 = vst.msk [vmem:[#allocation3 + $0x68] sm:$0xff] %vm1119, %v1116
      %1134 = vst.msk [vmem:[#allocation3 + $0x70] sm:$0xff] %vm1119, %v1117
      %1135 = vst.msk [vmem:[#allocation3 + $0x78] sm:$0xff] %vm1119, %v1118
      %v1136 = vld [vmem:[#allocation4] sm:$0xff]
      %v1137 = vld [vmem:[#allocation4 + $0x8] sm:$0xff]
      %v1138 = vld [vmem:[#allocation4 + $0x10] sm:$0xff]
      %v1139 = vld [vmem:[#allocation4 + $0x18] sm:$0xff]
      %v1140 = vld [vmem:[#allocation4 + $0x20] sm:$0xff]
      %v1141 = vld [vmem:[#allocation4 + $0x28] sm:$0xff]
      %v1142 = vld [vmem:[#allocation4 + $0x30] sm:$0xff]
      %v1143 = vld [vmem:[#allocation4 + $0x38] sm:$0xff]
      %v1144 = vld [vmem:[#allocation4 + $0x40] sm:$0xff]
      %v1145 = vld [vmem:[#allocation4 + $0x48] sm:$0xff]
      %v1146 = vld [vmem:[#allocation4 + $0x50] sm:$0xff]
      %v1147 = vld [vmem:[#allocation4 + $0x58] sm:$0xff]
      %v1148 = vld [vmem:[#allocation4 + $0x60] sm:$0xff]
      %v1149 = vld [vmem:[#allocation4 + $0x68] sm:$0xff]
      %v1150 = vld [vmem:[#allocation4 + $0x70] sm:$0xff]
      %v1151 = vld [vmem:[#allocation4 + $0x78] sm:$0xff]
      %v1152 = vmul.f32 %v687, %v1136
      %v1153 = vmul.f32 %v689, %v1137
      %v1154 = vmul.f32 %v691, %v1138
      %v1155 = vmul.f32 %v693, %v1139
      %v1156 = vmul.f32 %v695, %v1140
      %v1157 = vmul.f32 %v697, %v1141
      %v1158 = vmul.f32 %v699, %v1142
      %v1159 = vmul.f32 %v701, %v1143
      %v1160 = vmul.f32 %v703, %v1144
      %v1161 = vmul.f32 %v705, %v1145
      %v1162 = vmul.f32 %v707, %v1146
      %v1163 = vmul.f32 %v709, %v1147
      %v1164 = vmul.f32 %v711, %v1148
      %v1165 = vmul.f32 %v713, %v1149
      %v1166 = vmul.f32 %v715, %v1150
      %v1167 = vmul.f32 %v717, %v1151
      %v1168 = vadd.f32 %v1152, %v1040
      %v1169 = vadd.f32 %v1153, %v1042
      %v1170 = vadd.f32 %v1154, %v1044
      %v1171 = vadd.f32 %v1155, %v1046
      %v1172 = vadd.f32 %v1156, %v1048
      %v1173 = vadd.f32 %v1157, %v1050
      %v1174 = vadd.f32 %v1158, %v1052
      %v1175 = vadd.f32 %v1159, %v1054
      %v1176 = vadd.f32 %v1160, %v1056
      %v1177 = vadd.f32 %v1161, %v1058
      %v1178 = vadd.f32 %v1162, %v1060
      %v1179 = vadd.f32 %v1163, %v1062
      %v1180 = vadd.f32 %v1164, %v1064
      %v1181 = vadd.f32 %v1165, %v1066
      %v1182 = vadd.f32 %v1166, %v1068
      %v1183 = vadd.f32 %v1167, %v1070
      %1184 = vst.msk [vmem:[#allocation4] sm:$0xff] %vm1119, %v1168
      %1185 = vst.msk [vmem:[#allocation4 + $0x8] sm:$0xff] %vm1119, %v1169
      %1186 = vst.msk [vmem:[#allocation4 + $0x10] sm:$0xff] %vm1119, %v1170
      %1187 = vst.msk [vmem:[#allocation4 + $0x18] sm:$0xff] %vm1119, %v1171
      %1188 = vst.msk [vmem:[#allocation4 + $0x20] sm:$0xff] %vm1119, %v1172
      %1189 = vst.msk [vmem:[#allocation4 + $0x28] sm:$0xff] %vm1119, %v1173
      %1190 = vst.msk [vmem:[#allocation4 + $0x30] sm:$0xff] %vm1119, %v1174
      %1191 = vst.msk [vmem:[#allocation4 + $0x38] sm:$0xff] %vm1119, %v1175
      %1192 = vst.msk [vmem:[#allocation4 + $0x40] sm:$0xff] %vm1119, %v1176
      %1193 = vst.msk [vmem:[#allocation4 + $0x48] sm:$0xff] %vm1119, %v1177
      %1194 = vst.msk [vmem:[#allocation4 + $0x50] sm:$0xff] %vm1119, %v1178
      %1195 = vst.msk [vmem:[#allocation4 + $0x58] sm:$0xff] %vm1119, %v1179
      %1196 = vst.msk [vmem:[#allocation4 + $0x60] sm:$0xff] %vm1119, %v1180
      %1197 = vst.msk [vmem:[#allocation4 + $0x68] sm:$0xff] %vm1119, %v1181
      %1198 = vst.msk [vmem:[#allocation4 + $0x70] sm:$0xff] %vm1119, %v1182
      %1199 = vst.msk [vmem:[#allocation4 + $0x78] sm:$0xff] %vm1119, %v1183
      %1200 = vst.msk [vmem:[#allocation2] sm:$0xff] %vm1119, %v654
      %1201 = vst.msk [vmem:[#allocation2 + $0x8] sm:$0xff] %vm1119, %v655
      %1202 = vst.msk [vmem:[#allocation2 + $0x10] sm:$0xff] %vm1119, %v656
      %1203 = vst.msk [vmem:[#allocation2 + $0x18] sm:$0xff] %vm1119, %v657
      %1204 = vst.msk [vmem:[#allocation2 + $0x20] sm:$0xff] %vm1119, %v658
      %1205 = vst.msk [vmem:[#allocation2 + $0x28] sm:$0xff] %vm1119, %v659
      %1206 = vst.msk [vmem:[#allocation2 + $0x30] sm:$0xff] %vm1119, %v660
      %1207 = vst.msk [vmem:[#allocation2 + $0x38] sm:$0xff] %vm1119, %v661
      %1208 = vst.msk [vmem:[#allocation2 + $0x40] sm:$0xff] %vm1119, %v662
      %1209 = vst.msk [vmem:[#allocation2 + $0x48] sm:$0xff] %vm1119, %v663
      %1210 = vst.msk [vmem:[#allocation2 + $0x50] sm:$0xff] %vm1119, %v664
      %1211 = vst.msk [vmem:[#allocation2 + $0x58] sm:$0xff] %vm1119, %v665
      %1212 = vst.msk [vmem:[#allocation2 + $0x60] sm:$0xff] %vm1119, %v666
      %1213 = vst.msk [vmem:[#allocation2 + $0x68] sm:$0xff] %vm1119, %v667
      %1214 = vst.msk [vmem:[#allocation2 + $0x70] sm:$0xff] %vm1119, %v668
      %1215 = vst.msk [vmem:[#allocation2 + $0x78] sm:$0xff] %vm1119, %v669
      %p1216 = scmp.eq.s32.totalorder %s20, 1
      // Predicated region
      $region41: #{tpu_custom_call.1} parent=35 // pred_check
        %p1217 = pneg %p1216
      $region42: #{tpu_custom_call.1} parent=35 // pred_check_branch
        %1219 = sbr.rel (%p1217) target = $region44
      $region43: #{tpu_custom_call.1} parent=35 // pred_region
        %v1220 = vld [vmem:[#allocation4] sm:$0xff]
        %v1221 = vld [vmem:[#allocation4 + $0x8] sm:$0xff]
        %v1222 = vld [vmem:[#allocation4 + $0x10] sm:$0xff]
        %v1223 = vld [vmem:[#allocation4 + $0x18] sm:$0xff]
        %v1224 = vld [vmem:[#allocation4 + $0x20] sm:$0xff]
        %v1225 = vld [vmem:[#allocation4 + $0x28] sm:$0xff]
        %v1226 = vld [vmem:[#allocation4 + $0x30] sm:$0xff]
        %v1227 = vld [vmem:[#allocation4 + $0x38] sm:$0xff]
        %v1228 = vld [vmem:[#allocation4 + $0x40] sm:$0xff]
        %v1229 = vld [vmem:[#allocation4 + $0x48] sm:$0xff]
        %v1230 = vld [vmem:[#allocation4 + $0x50] sm:$0xff]
        %v1231 = vld [vmem:[#allocation4 + $0x58] sm:$0xff]
        %v1232 = vld [vmem:[#allocation4 + $0x60] sm:$0xff]
        %v1233 = vld [vmem:[#allocation4 + $0x68] sm:$0xff]
        %v1234 = vld [vmem:[#allocation4 + $0x70] sm:$0xff]
        %v1235 = vld [vmem:[#allocation4 + $0x78] sm:$0xff]
        %v1236 = vld [vmem:[#allocation3] sm:$0xff]
        %v1237 = vld [vmem:[#allocation3 + $0x8] sm:$0xff]
        %v1238 = vld [vmem:[#allocation3 + $0x10] sm:$0xff]
        %v1239 = vld [vmem:[#allocation3 + $0x18] sm:$0xff]
        %v1240 = vld [vmem:[#allocation3 + $0x20] sm:$0xff]
        %v1241 = vld [vmem:[#allocation3 + $0x28] sm:$0xff]
        %v1242 = vld [vmem:[#allocation3 + $0x30] sm:$0xff]
        %v1243 = vld [vmem:[#allocation3 + $0x38] sm:$0xff]
        %v1244 = vld [vmem:[#allocation3 + $0x40] sm:$0xff]
        %v1245 = vld [vmem:[#allocation3 + $0x48] sm:$0xff]
        %v1246 = vld [vmem:[#allocation3 + $0x50] sm:$0xff]
        %v1247 = vld [vmem:[#allocation3 + $0x58] sm:$0xff]
        %v1248 = vld [vmem:[#allocation3 + $0x60] sm:$0xff]
        %v1249 = vld [vmem:[#allocation3 + $0x68] sm:$0xff]
        %v1250 = vld [vmem:[#allocation3 + $0x70] sm:$0xff]
        %v1251 = vld [vmem:[#allocation3 + $0x78] sm:$0xff]
        %v1252 = vrcp.pop %v1236
        %v1253 = vrcp.pop %v1237
        %v1254 = vrcp.pop %v1238
        %v1255 = vrcp.pop %v1239
        %v1256 = vrcp.pop %v1240
        %v1257 = vrcp.pop %v1241
        %v1258 = vrcp.pop %v1242
        %v1259 = vrcp.pop %v1243
        %v1260 = vrcp.pop %v1244
        %v1261 = vrcp.pop %v1245
        %v1262 = vrcp.pop %v1246
        %v1263 = vrcp.pop %v1247
        %v1264 = vrcp.pop %v1248
        %v1265 = vrcp.pop %v1249
        %v1266 = vrcp.pop %v1250
        %v1267 = vrcp.pop %v1251
        %v1268 = vmul.f32 %v1220, %v1252
        %v1269 = vmul.f32 %v1221, %v1253
        %v1270 = vmul.f32 %v1222, %v1254
        %v1271 = vmul.f32 %v1223, %v1255
        %v1272 = vmul.f32 %v1224, %v1256
        %v1273 = vmul.f32 %v1225, %v1257
        %v1274 = vmul.f32 %v1226, %v1258
        %v1275 = vmul.f32 %v1227, %v1259
        %v1276 = vmul.f32 %v1228, %v1260
        %v1277 = vmul.f32 %v1229, %v1261
        %v1278 = vmul.f32 %v1230, %v1262
        %v1279 = vmul.f32 %v1231, %v1263
        %v1280 = vmul.f32 %v1232, %v1264
        %v1281 = vmul.f32 %v1233, %v1265
        %v1282 = vmul.f32 %v1234, %v1266
        %v1283 = vmul.f32 %v1235, %v1267
        %1284 = vst.msk [vmem:[%s277] sm:$0xff] %vm1119, %v1268
        %1285 = vst.msk [vmem:[%s277 + $0x8] sm:$0xff] %vm1119, %v1269
        %1286 = vst.msk [vmem:[%s277 + $0x10] sm:$0xff] %vm1119, %v1270
        %1287 = vst.msk [vmem:[%s277 + $0x18] sm:$0xff] %vm1119, %v1271
        %1288 = vst.msk [vmem:[%s277 + $0x20] sm:$0xff] %vm1119, %v1272
        %1289 = vst.msk [vmem:[%s277 + $0x28] sm:$0xff] %vm1119, %v1273
        %1290 = vst.msk [vmem:[%s277 + $0x30] sm:$0xff] %vm1119, %v1274
        %1291 = vst.msk [vmem:[%s277 + $0x38] sm:$0xff] %vm1119, %v1275
        %1292 = vst.msk [vmem:[%s277 + $0x40] sm:$0xff] %vm1119, %v1276
        %1293 = vst.msk [vmem:[%s277 + $0x48] sm:$0xff] %vm1119, %v1277
        %1294 = vst.msk [vmem:[%s277 + $0x50] sm:$0xff] %vm1119, %v1278
        %1295 = vst.msk [vmem:[%s277 + $0x58] sm:$0xff] %vm1119, %v1279
        %1296 = vst.msk [vmem:[%s277 + $0x60] sm:$0xff] %vm1119, %v1280
        %1297 = vst.msk [vmem:[%s277 + $0x68] sm:$0xff] %vm1119, %v1281
        %1298 = vst.msk [vmem:[%s277 + $0x70] sm:$0xff] %vm1119, %v1282
        %1299 = vst.msk [vmem:[%s277 + $0x78] sm:$0xff] %vm1119, %v1283
      $region44: #{tpu_custom_call.1} parent=35 // pred_fallthru
        _
      %s1300 = smul.u32 16, %s19
      %p1301 = scmp.lt.s32.totalorder %s1300, 31
      %s1302 = scalar_select %p1301, %s1300, 31
      %s1303 = smul.addr %s1302, 8
      %s1304 = scalar_lea.vmem %s4, %s1303
      // Predicated region
      $region45: #{tpu_custom_call.1} parent=35 // pred_check
        %p1305 = pneg %p149
      $region46: #{tpu_custom_call.1} parent=35 // pred_check_branch
        %1307 = sbr.rel (%p1305) target = $region48
      $region47: #{tpu_custom_call.1} parent=35 // pred_region
        %s1308 = smul.u32 16, %s19
      $region48: #{tpu_custom_call.1} parent=35 // pred_fallthru
        _
    $region36: #{tpu_custom_call.1} parent=5 // pred_fallthru
      _
    %p1309 = scmp.le.s32.totalorder 2, %s10
    // Predicated region
    $region49: #{tpu_custom_call.1} parent=5 // pred_check
      %p1310 = pneg %p1309
    $region50: #{tpu_custom_call.1} parent=5 // pred_check_branch
      %1312 = sbr.rel (%p1310) target = $region52
    $region51: #{tpu_custom_call.1} parent=5 // pred_region
      %s1313 = ssub.s32 %s10, 2
      // Predicated region
      $region53: #{tpu_custom_call.1} parent=51 // pred_check
        %p1314 = pneg %p155
      $region54: #{tpu_custom_call.1} parent=51 // pred_check_branch
        %1316 = sbr.rel (%p1314) target = $region56
      $region55: #{tpu_custom_call.1} parent=51 // pred_region
        %s1317 = smul.u32 16, %s21
        %p1318 = scmp.lt.s32.totalorder %s1317, 31
        %s1319 = scalar_select %p1318, %s1317, 31
        %s1320 = smul.addr %s1319, 8
        %s1321 = scalar_lea.vmem %s4, %s1320
      $region56: #{tpu_custom_call.1} parent=51 // pred_fallthru
        _
    $region52: #{tpu_custom_call.1} parent=5 // pred_fallthru
      _
  $region6: #{tpu_custom_call.1} parent=0 // loop_footer
    %s14 = sadd.s32 1, %s10
  $region7: #{tpu_custom_call.1} parent=0 // loop_footer_branch
    %9 = sbr.rel target = $region3
  $region8: #{tpu_custom_call.1} parent=0 // loop_exit
    _

</llo_original>
